<compile_context>
chip_gen: v7x
topology: tpu7x:2x2x1
jax: 0.10.0
libtpu: 0.0.40
codegen_flags: <defaults>
</compile_context>

<pallas_src>
import math
from functools import partial

import jax
import jax.numpy as jnp
from jax.experimental import pallas as pl
from jax.experimental.pallas import tpu as pltpu


def _ula_fused_kernel(x_ref, y0_ref, noise_ref, w1_ref, w1t_ref, b1_ref,
                      w2t_ref, out_ref, *, coef, mse_coef, sqrt_eta):
    """One grid step == one ULA step.  y is carried in the resident out block."""
    s = pl.program_id(0)

    @pl.when(s == 0)
    def _init():
        out_ref[...] = y0_ref[...]          # load initial proposal into the accumulator

    y = out_ref[...]                        # (Bp, Dp) f32, VMEM-resident across steps
    x = x_ref[...]                          # (Bp, Dp) f32, resident

    # f_net forward: h = tanh(y @ W1 + b1)
    h = jnp.tanh(jnp.dot(y, w1_ref[...], preferred_element_type=jnp.float32)
                 + b1_ref[...])             # (Bp, Hp)

    # grad_y f(y) = ((1 - h^2) * w2^T) @ W1^T   (W1^T pre-transposed in wrapper)
    g = (1.0 - h * h) * w2t_ref[...]        # (Bp, Hp)
    grad_f = jnp.dot(g, w1t_ref[...], preferred_element_type=jnp.float32)  # (Bp, Dp)

    # y <- y + (eta/2/eps) * grad_f - (eta/eps/D) * (y - x) + sqrt(eta) * noise
    out_ref[...] = (y + coef * grad_f - mse_coef * (y - x)
                    + sqrt_eta * noise_ref[0])


def _pad2(a, rows, cols):
    return jnp.pad(a, ((0, rows - a.shape[0]), (0, cols - a.shape[1])))


def egnot_sample(x_nchw, w1, b1, w2t, key, *, eps=1.0, eta=0.05,
                 ula_steps=10, proposal_z=None):
    """EgNOT.forward(x) == EgNOT.sample(x): ULA with the potential score."""
    B, C, Hs, Ws = x_nchw.shape
    D = C * Hs * Ws
    H = w1.shape[1]
    x2d = x_nchw.reshape(B, D).astype(jnp.float32)

    if proposal_z is None:
        key, k = jax.random.split(key)
        y2d = jax.random.normal(k, (B, D), dtype=jnp.float32)
    else:
        y2d = proposal_z.reshape(B, D).astype(jnp.float32)

    # One RNG call for all steps' noise (i.i.d. Gaussian, same semantics as
    # the per-step torch.randn_like in the reference).
    key, k = jax.random.split(key)
    noise = jax.random.normal(k, (ula_steps, B, D), dtype=jnp.float32)

    # Pad to TPU-friendly shapes: batch -> x8 sublanes, hidden/feature -> x128 lanes.
    Bp = max(8, ((B + 7) // 8) * 8)
    Hp = max(128, ((H + 127) // 128) * 128)
    Dp = max(128, ((D + 127) // 128) * 128)

    x_p = _pad2(x2d, Bp, Dp)
    y_p = _pad2(y2d, Bp, Dp)
    noise_p = jnp.pad(noise, ((0, 0), (0, Bp - B), (0, Dp - D)))
    w1_p = _pad2(w1.astype(jnp.float32), Dp, Hp)           # (Dp, Hp)
    w1t_p = w1_p.T                                         # (Hp, Dp) transposed once
    b1_p = jnp.broadcast_to(_pad2(b1.astype(jnp.float32), 1, Hp), (Bp, Hp))
    w2t_p = jnp.broadcast_to(_pad2(w2t.astype(jnp.float32), 1, Hp), (Bp, Hp))

    # Scalar coefficients folded at trace time (note: real D, not padded Dp).
    coef = 0.5 * eta / eps
    mse_coef = coef * 2.0 / D
    kernel = partial(_ula_fused_kernel, coef=coef, mse_coef=mse_coef,
                     sqrt_eta=math.sqrt(eta))

    y_out = pl.pallas_call(
        kernel,
        out_shape=jax.ShapeDtypeStruct((Bp, Dp), jnp.float32),
        grid=(ula_steps,),
        in_specs=[
            pl.BlockSpec((Bp, Dp), lambda s: (0, 0)),        # x        (resident)
            pl.BlockSpec((Bp, Dp), lambda s: (0, 0)),        # y0       (resident)
            pl.BlockSpec((1, Bp, Dp), lambda s: (s, 0, 0)),  # noise    (per-step stream)
            pl.BlockSpec((Dp, Hp), lambda s: (0, 0)),        # W1       (resident)
            pl.BlockSpec((Hp, Dp), lambda s: (0, 0)),        # W1^T     (resident)
            pl.BlockSpec((Bp, Hp), lambda s: (0, 0)),        # b1 bcast (resident)
            pl.BlockSpec((Bp, Hp), lambda s: (0, 0)),        # w2^T bc  (resident)
        ],
        out_specs=pl.BlockSpec((Bp, Dp), lambda s: (0, 0)),  # y accumulator
        compiler_params=pltpu.CompilerParams(
            dimension_semantics=("arbitrary",)),             # steps are sequential
    )(x_p, y_p, noise_p, w1_p, w1t_p, b1_p, w2t_p)

    return y_out[:B, :D].reshape(B, C, Hs, Ws)


if __name__ == "__main__":
    # Small deterministic setup consistent with the module's forward.
    B, C, Hs, Ws = 2, 4, 16, 16
    D = C * Hs * Ws
    HID = 32
    EPS = 1.0

    key = jax.random.PRNGKey(0)
    kx, kw1, kw2, ksample = jax.random.split(key, 4)

    x = jax.random.normal(kx, (B, C, Hs, Ws), dtype=jnp.float32)

    # Deterministic f_net parameters (synthetic init, not a checkpoint).
    w1 = jax.random.normal(kw1, (D, HID), dtype=jnp.float32) / math.sqrt(D)
    b1 = jnp.zeros((1, HID), dtype=jnp.float32)
    w2t = jax.random.normal(kw2, (1, HID), dtype=jnp.float32) / math.sqrt(HID)
    # TODO(synk): the output-head bias b2 has zero gradient wrt y, so it is
    # omitted from the kernel (it cannot affect the sampled output).

    out = egnot_sample(x, w1, b1, w2t, ksample, eps=EPS, eta=0.05, ula_steps=10)
    jax.block_until_ready(out)
    assert out.shape == (B, C, Hs, Ws) and out.dtype == jnp.float32
    print("KERNEL_OK")
</pallas_src>

<mosaic_0001>
module attributes {stable_mosaic.version = 11 : i64} {
  func.func @_ula_fused_kernel(%arg0: i32, %arg1: memref<8x1024xf32, #tpu.memory_space<vmem>>, %arg2: memref<8x1024xf32, #tpu.memory_space<vmem>>, %arg3: memref<1x8x1024xf32, #tpu.memory_space<vmem>>, %arg4: memref<1024x128xf32, #tpu.memory_space<vmem>>, %arg5: memref<128x1024xf32, #tpu.memory_space<vmem>>, %arg6: memref<8x128xf32, #tpu.memory_space<vmem>>, %arg7: memref<8x128xf32, #tpu.memory_space<vmem>>, %arg8: memref<8x1024xf32, #tpu.memory_space<vmem>>) attributes {dimension_semantics = [#tpu.dimension_semantics<arbitrary>], iteration_bounds = array<i64: 10>, scalar_prefetch = 0 : i64, scratch_operands = 0 : i64, tpu.core_type = #tpu.core_type<tc>, window_params = [{pipeline_mode = #tpu.pipeline_mode<synchronous>, transform_indices = @transform_0, window_bounds = array<i64: 8, 1024>}, {pipeline_mode = #tpu.pipeline_mode<synchronous>, transform_indices = @transform_1, window_bounds = array<i64: 8, 1024>}, {transform_indices = @transform_2, window_bounds = array<i64: 1, 8, 1024>}, {pipeline_mode = #tpu.pipeline_mode<synchronous>, transform_indices = @transform_3, window_bounds = array<i64: 1024, 128>}, {pipeline_mode = #tpu.pipeline_mode<synchronous>, transform_indices = @transform_4, window_bounds = array<i64: 128, 1024>}, {pipeline_mode = #tpu.pipeline_mode<synchronous>, transform_indices = @transform_5, window_bounds = array<i64: 8, 128>}, {pipeline_mode = #tpu.pipeline_mode<synchronous>, transform_indices = @transform_6, window_bounds = array<i64: 8, 128>}, {pipeline_mode = #tpu.pipeline_mode<synchronous>, transform_indices = @transform_7, window_bounds = array<i64: 8, 1024>}]} {
    %c0_i32 = arith.constant 0 : i32
    %0 = arith.cmpi eq, %arg0, %c0_i32 : i32
    %1 = arith.extui %0 : i1 to i32
    %c0_i32_0 = arith.constant 0 : i32
    %2 = arith.cmpi ne, %1, %c0_i32_0 : i32
    scf.if %2 {
      %c0_22 = arith.constant 0 : index
      %c0_23 = arith.constant 0 : index
      %30 = vector.load %arg2[%c0_22, %c0_23] : memref<8x1024xf32, #tpu.memory_space<vmem>>, vector<8x1024xf32>
      %c0_24 = arith.constant 0 : index
      %c0_25 = arith.constant 0 : index
      %31 = vector.load %arg8[%c0_24, %c0_25] : memref<8x1024xf32, #tpu.memory_space<vmem>>, vector<8x1024xf32>
      tpu.vector_store %arg8[%c0_24, %c0_25], %30 {strides = array<i32>} : memref<8x1024xf32, #tpu.memory_space<vmem>>, vector<8x1024xf32>,
    } else {
    }
    %c0 = arith.constant 0 : index
    %c0_1 = arith.constant 0 : index
    %3 = vector.load %arg8[%c0, %c0_1] : memref<8x1024xf32, #tpu.memory_space<vmem>>, vector<8x1024xf32>
    %c0_2 = arith.constant 0 : index
    %c0_3 = arith.constant 0 : index
    %4 = vector.load %arg1[%c0_2, %c0_3] : memref<8x1024xf32, #tpu.memory_space<vmem>>, vector<8x1024xf32>
    %c0_4 = arith.constant 0 : index
    %c0_5 = arith.constant 0 : index
    %5 = vector.load %arg4[%c0_4, %c0_5] : memref<1024x128xf32, #tpu.memory_space<vmem>>, vector<1024x128xf32>
    %cst = arith.constant dense<0.000000e+00> : vector<8x128xf32>
    %6 = tpu.matmul %3, %5, %cst {dimension_numbers = #tpu.dot_dimension_numbers<[1], [0], [0], [1], [0, 0, 1, 1], [], []>} : vector<8x1024xf32>, vector<1024x128xf32>, vector<8x128xf32> -> vector<8x128xf32>
    %c0_6 = arith.constant 0 : index
    %c0_7 = arith.constant 0 : index
    %7 = vector.load %arg6[%c0_6, %c0_7] : memref<8x128xf32, #tpu.memory_space<vmem>>, vector<8x128xf32>
    %8 = arith.addf %6, %7 : vector<8x128xf32>
    %9 = math.tanh %8 : vector<8x128xf32>
    %10 = arith.mulf %9, %9 : vector<8x128xf32>
    %cst_8 = arith.constant 1.000000e+00 : f32
    %11 = vector.broadcast %cst_8 : f32 to vector<8x128xf32>
    %12 = arith.subf %11, %10 : vector<8x128xf32>
    %c0_9 = arith.constant 0 : index
    %c0_10 = arith.constant 0 : index
    %13 = vector.load %arg7[%c0_9, %c0_10] : memref<8x128xf32, #tpu.memory_space<vmem>>, vector<8x128xf32>
    %14 = arith.mulf %12, %13 : vector<8x128xf32>
    %c0_11 = arith.constant 0 : index
    %c0_12 = arith.constant 0 : index
    %15 = vector.load %arg5[%c0_11, %c0_12] : memref<128x1024xf32, #tpu.memory_space<vmem>>, vector<128x1024xf32>
    %cst_13 = arith.constant dense<0.000000e+00> : vector<8x1024xf32>
    %16 = tpu.matmul %14, %15, %cst_13 {dimension_numbers = #tpu.dot_dimension_numbers<[1], [0], [0], [1], [0, 0, 1, 1], [], []>} : vector<8x128xf32>, vector<128x1024xf32>, vector<8x1024xf32> -> vector<8x1024xf32>
    %cst_14 = arith.constant 2.500000e-02 : f32
    %17 = vector.broadcast %cst_14 : f32 to vector<8x1024xf32>
    %18 = arith.mulf %17, %16 : vector<8x1024xf32>
    %19 = arith.addf %3, %18 : vector<8x1024xf32>
    %20 = arith.subf %3, %4 : vector<8x1024xf32>
    %cst_15 = arith.constant 4.88281257E-5 : f32
    %21 = vector.broadcast %cst_15 : f32 to vector<8x1024xf32>
    %22 = arith.mulf %21, %20 : vector<8x1024xf32>
    %23 = arith.subf %19, %22 : vector<8x1024xf32>
    %c0_16 = arith.constant 0 : index
    %c0_17 = arith.constant 0 : index
    %c0_18 = arith.constant 0 : index
    %24 = vector.load %arg3[%c0_16, %c0_17, %c0_18] : memref<1x8x1024xf32, #tpu.memory_space<vmem>>, vector<1x8x1024xf32>
    %25 = vector.shape_cast %24 : vector<1x8x1024xf32> to vector<8x1024xf32>
    %cst_19 = arith.constant 0.223606795 : f32
    %26 = vector.broadcast %cst_19 : f32 to vector<8x1024xf32>
    %27 = arith.mulf %26, %25 : vector<8x1024xf32>
    %28 = arith.addf %23, %27 : vector<8x1024xf32>
    %c0_20 = arith.constant 0 : index
    %c0_21 = arith.constant 0 : index
    %29 = vector.load %arg8[%c0_20, %c0_21] : memref<8x1024xf32, #tpu.memory_space<vmem>>, vector<8x1024xf32>
    tpu.vector_store %arg8[%c0_20, %c0_21], %28 {strides = array<i32>} : memref<8x1024xf32, #tpu.memory_space<vmem>>, vector<8x1024xf32>,
    return
  }
  func.func @transform_0(%arg0: i32) -> (i32, i32) {
    %c0_i32 = arith.constant 0 : i32
    %c0_i32_0 = arith.constant 0 : i32
    %c0_i32_1 = arith.constant 0 : i32
    return %c0_i32, %c0_i32_0 : i32, i32
  }
  func.func @transform_1(%arg0: i32) -> (i32, i32) {
    %c0_i32 = arith.constant 0 : i32
    %c0_i32_0 = arith.constant 0 : i32
    %c0_i32_1 = arith.constant 0 : i32
    return %c0_i32, %c0_i32_0 : i32, i32
  }
  func.func @transform_2(%arg0: i32) -> (i32, i32, i32) {
    %c0_i32 = arith.constant 0 : i32
    %c0_i32_0 = arith.constant 0 : i32
    %c0_i32_1 = arith.constant 0 : i32
    return %arg0, %c0_i32, %c0_i32_0 : i32, i32, i32
  }
  func.func @transform_3(%arg0: i32) -> (i32, i32) {
    %c0_i32 = arith.constant 0 : i32
    %c0_i32_0 = arith.constant 0 : i32
    %c0_i32_1 = arith.constant 0 : i32
    return %c0_i32, %c0_i32_0 : i32, i32
  }
  func.func @transform_4(%arg0: i32) -> (i32, i32) {
    %c0_i32 = arith.constant 0 : i32
    %c0_i32_0 = arith.constant 0 : i32
    %c0_i32_1 = arith.constant 0 : i32
    return %c0_i32, %c0_i32_0 : i32, i32
  }
  func.func @transform_5(%arg0: i32) -> (i32, i32) {
    %c0_i32 = arith.constant 0 : i32
    %c0_i32_0 = arith.constant 0 : i32
    %c0_i32_1 = arith.constant 0 : i32
    return %c0_i32, %c0_i32_0 : i32, i32
  }
  func.func @transform_6(%arg0: i32) -> (i32, i32) {
    %c0_i32 = arith.constant 0 : i32
    %c0_i32_0 = arith.constant 0 : i32
    %c0_i32_1 = arith.constant 0 : i32
    return %c0_i32, %c0_i32_0 : i32, i32
  }
  func.func @transform_7(%arg0: i32) -> (i32, i32) {
    %c0_i32 = arith.constant 0 : i32
    %c0_i32_0 = arith.constant 0 : i32
    %c0_i32_1 = arith.constant 0 : i32
    return %c0_i32, %c0_i32_0 : i32, i32
  }
}

</mosaic_0001>

<llo_original>
// kernel: tpu_custom_call.1
$region0: #{tpu_custom_call.1}
  #allocation0 [shape = 'u32[]', space=smem, size = 0x4, offset = 0x4, fixed_abs, tag = 'smem constant byte address 0x4 - core index']
  #allocation1 [shape = 'u32[144,128]{1,0:T(1,128)}', space=vmem, size = 0x12000, scoped, tag = 'internal scratch']
  %s0 = inlined_call_operand.hbm [shape: f32[8,1024], index: 0, kind: input, shape index: {}]
  %s1 = inlined_call_operand.hbm [shape: f32[8,1024], index: 1, kind: input, shape index: {}]
  %s2 = inlined_call_operand.hbm [shape: f32[10,8,1024], index: 2, kind: input, shape index: {}]
  %s3 = inlined_call_operand.hbm [shape: f32[1024,128], index: 3, kind: input, shape index: {}]
  %s4 = inlined_call_operand.hbm [shape: f32[128,1024], index: 4, kind: input, shape index: {}]
  %s5 = inlined_call_operand.vmem [shape: f32[8,128], index: 5, kind: input, shape index: {}]
  %s6 = inlined_call_operand.vmem [shape: f32[8,128], index: 6, kind: input, shape index: {}]
  %s7 = inlined_call_operand.hbm [shape: f32[8,1024], index: 7, kind: output, shape index: {}]
  %s8 = sld [smem:[#allocation0]]
  $region85: #{tpu_custom_call.1} parent=0
    _
  %s10 = ssub.s32 1, %s8
  %s11 = scalar_select 0, %s10, %s8
  $region1: #{tpu_custom_call.1} parent=0
    #allocation2 [shape = 'u8[32768]{0}', space=vmem, size = 0x8000, scoped, tag = 'input window, operand 0, single buffered']
    #allocation3 [shape = 's32[2]{0}', space=sflag, size = 0x8, scoped, tag = 'scoped memory for tpu_custom_call.1']
    #allocation4 [shape = 's32[2]{0}', space=sflag, size = 0x8, scoped, tag = 'scoped memory for tpu_custom_call.1']
    #allocation5 [shape = 'u8[32768]{0}', space=vmem, size = 0x8000, scoped, tag = 'input window, operand 1, single buffered']
    #allocation6 [shape = 's32[1]{0}', space=sflag, size = 0x4, scoped, tag = 'scoped memory for tpu_custom_call.1']
    #allocation7 [shape = 'u8[65536]{0}', space=vmem, size = 0x10000, scoped, tag = 'input window, operand 2']
    #allocation8 [shape = 'u8[524288]{0}', space=vmem, size = 0x80000, scoped, tag = 'input window, operand 3, single buffered']
    #allocation9 [shape = 'u8[524288]{0}', space=vmem, size = 0x80000, scoped, tag = 'input window, operand 4, single buffered']
    #allocation10 [shape = 's32[1]{0}', space=sflag, size = 0x4, scoped, tag = 'scoped memory for tpu_custom_call.1']
    #allocation11 [shape = 'u8[32768]{0}', space=vmem, size = 0x8000, scoped, tag = 'output window, operand 0, single buffered']
    %12 = vsyncpa [#allocation3], 0
    %13 = vsyncpa [#allocation6], 0
    %14 = vsyncpa [#allocation10], 0
    %15 = vsyncpa [#allocation4], 0
    loop: start=0, step=1, limit=12
    $region2: #{tpu_custom_call.1} parent=1 // loop_pre_header
      _
    $region3: #{tpu_custom_call.1} parent=1 // loop_header
      %s17 = sphi 0, %s21
      %p18 = scmp.ge.s32.totalorder %s17, 12
      %s25 = sphi 0, %s25
      %s27 = sphi 0, %s25
      %s28 = sphi 0, %s27
      %s42 = sphi 0, %s28
      %s46 = sphi 0, %s46
      %s48 = sphi 0, %s46
      %s49 = sphi 0, %s48
      %s63 = sphi 0, %s49
      %s69 = sphi 0, %s71
      %s72 = sphi 0, %s69
      %s73 = sphi 0, %s72
      %s89 = sphi 0, %s73
      %s93 = sphi 0, %s93
      %s95 = sphi 0, %s93
      %s96 = sphi 0, %s95
      %s110 = sphi 0, %s96
      %s114 = sphi 0, %s114
      %s116 = sphi 0, %s114
      %s117 = sphi 0, %s116
      %s131 = sphi 0, %s117
      %s135 = sphi 0, %s135
      %s137 = sphi 0, %s135
      %s138 = sphi 0, %s137
      %s152 = sphi 0, %s138
      %s156 = sphi 0, %s156
      %s158 = sphi 0, %s156
      %s159 = sphi 0, %s158
      %s173 = sphi 0, %s159
      %s177 = sphi 0, %s177
      %s179 = sphi 0, %s177
      %s180 = sphi 0, %s179
      %s194 = sphi 0, %s180
    $region4: #{tpu_custom_call.1} parent=1 // loop_header_branch
      %20 = sbr.rel (%p18) target = $region8
    $region5: #{tpu_custom_call.1} parent=1 // loop_body
      %s22 = ssub.s32 %s17, 1
      %s23 = ssub.s32 %s17, 2
      %s24 = sadd.s32 %s17, 1
      %s26 = sadd.s32 %s25, 1
      %p29 = scmp.eq.s32.totalorder %s17, 9
      %p30 = scmp.ne.s32.totalorder %s25, %s27
      %p31 = scmp.eq.s32.totalorder %s17, 0
      %p32 = por %p30, %p31
      %p33 = scmp.ne.s32.totalorder %s25, %s27
      %p34 = scmp.eq.s32.totalorder %s22, 9
      %p35 = por %p33, %p34
      %p36 = scmp.ne.s32.totalorder %s27, %s28
      %p37 = scmp.eq.s32.totalorder %s22, 0
      %p38 = por %p36, %p37
      %p39 = scmp.ne.s32.totalorder %s27, %s28
      %p40 = scmp.eq.s32.totalorder %s23, 9
      %p41 = por %p39, %p40
      %p43 = scmp.ne.s32.totalorder %s28, %s42
      %p44 = scmp.eq.s32.totalorder %s23, 0
      %p45 = por %p43, %p44
      %s47 = sadd.s32 %s46, 1
      %p50 = scmp.eq.s32.totalorder %s17, 9
      %p51 = scmp.ne.s32.totalorder %s46, %s48
      %p52 = scmp.eq.s32.totalorder %s17, 0
      %p53 = por %p51, %p52
      %p54 = scmp.ne.s32.totalorder %s46, %s48
      %p55 = scmp.eq.s32.totalorder %s22, 9
      %p56 = por %p54, %p55
      %p57 = scmp.ne.s32.totalorder %s48, %s49
      %p58 = scmp.eq.s32.totalorder %s22, 0
      %p59 = por %p57, %p58
      %p60 = scmp.ne.s32.totalorder %s48, %s49
      %p61 = scmp.eq.s32.totalorder %s23, 9
      %p62 = por %p60, %p61
      %p64 = scmp.ne.s32.totalorder %s49, %s63
      %p65 = scmp.eq.s32.totalorder %s23, 0
      %p66 = por %p64, %p65
      %s67 = ssub.s32 %s17, %s24
      %p68 = scmp.eq.s32.totalorder %s67, 0
      %s70 = sadd.s32 %s69, 1
      %s71 = scalar_select %p68, %s69, %s70
      %p74 = pneg %p68
      %p75 = scmp.eq.s32.totalorder %s17, 9
      %p76 = por %p74, %p75
      %p77 = scmp.ne.s32.totalorder %s69, %s72
      %p78 = scmp.eq.s32.totalorder %s17, 0
      %p79 = por %p77, %p78
      %p80 = scmp.ne.s32.totalorder %s69, %s72
      %p81 = scmp.eq.s32.totalorder %s22, 9
      %p82 = por %p80, %p81
      %p83 = scmp.ne.s32.totalorder %s72, %s73
      %p84 = scmp.eq.s32.totalorder %s22, 0
      %p85 = por %p83, %p84
      %p86 = scmp.ne.s32.totalorder %s72, %s73
      %p87 = scmp.eq.s32.totalorder %s23, 9
      %p88 = por %p86, %p87
      %p90 = scmp.ne.s32.totalorder %s73, %s89
      %p91 = scmp.eq.s32.totalorder %s23, 0
      %p92 = por %p90, %p91
      %s94 = sadd.s32 %s93, 1
      %p97 = scmp.eq.s32.totalorder %s17, 9
      %p98 = scmp.ne.s32.totalorder %s93, %s95
      %p99 = scmp.eq.s32.totalorder %s17, 0
      %p100 = por %p98, %p99
      %p101 = scmp.ne.s32.totalorder %s93, %s95
      %p102 = scmp.eq.s32.totalorder %s22, 9
      %p103 = por %p101, %p102
      %p104 = scmp.ne.s32.totalorder %s95, %s96
      %p105 = scmp.eq.s32.totalorder %s22, 0
      %p106 = por %p104, %p105
      %p107 = scmp.ne.s32.totalorder %s95, %s96
      %p108 = scmp.eq.s32.totalorder %s23, 9
      %p109 = por %p107, %p108
      %p111 = scmp.ne.s32.totalorder %s96, %s110
      %p112 = scmp.eq.s32.totalorder %s23, 0
      %p113 = por %p111, %p112
      %s115 = sadd.s32 %s114, 1
      %p118 = scmp.eq.s32.totalorder %s17, 9
      %p119 = scmp.ne.s32.totalorder %s114, %s116
      %p120 = scmp.eq.s32.totalorder %s17, 0
      %p121 = por %p119, %p120
      %p122 = scmp.ne.s32.totalorder %s114, %s116
      %p123 = scmp.eq.s32.totalorder %s22, 9
      %p124 = por %p122, %p123
      %p125 = scmp.ne.s32.totalorder %s116, %s117
      %p126 = scmp.eq.s32.totalorder %s22, 0
      %p127 = por %p125, %p126
      %p128 = scmp.ne.s32.totalorder %s116, %s117
      %p129 = scmp.eq.s32.totalorder %s23, 9
      %p130 = por %p128, %p129
      %p132 = scmp.ne.s32.totalorder %s117, %s131
      %p133 = scmp.eq.s32.totalorder %s23, 0
      %p134 = por %p132, %p133
      %s136 = sadd.s32 %s135, 1
      %p139 = scmp.eq.s32.totalorder %s17, 9
      %p140 = scmp.ne.s32.totalorder %s135, %s137
      %p141 = scmp.eq.s32.totalorder %s17, 0
      %p142 = por %p140, %p141
      %p143 = scmp.ne.s32.totalorder %s135, %s137
      %p144 = scmp.eq.s32.totalorder %s22, 9
      %p145 = por %p143, %p144
      %p146 = scmp.ne.s32.totalorder %s137, %s138
      %p147 = scmp.eq.s32.totalorder %s22, 0
      %p148 = por %p146, %p147
      %p149 = scmp.ne.s32.totalorder %s137, %s138
      %p150 = scmp.eq.s32.totalorder %s23, 9
      %p151 = por %p149, %p150
      %p153 = scmp.ne.s32.totalorder %s138, %s152
      %p154 = scmp.eq.s32.totalorder %s23, 0
      %p155 = por %p153, %p154
      %s157 = sadd.s32 %s156, 1
      %p160 = scmp.eq.s32.totalorder %s17, 9
      %p161 = scmp.ne.s32.totalorder %s156, %s158
      %p162 = scmp.eq.s32.totalorder %s17, 0
      %p163 = por %p161, %p162
      %p164 = scmp.ne.s32.totalorder %s156, %s158
      %p165 = scmp.eq.s32.totalorder %s22, 9
      %p166 = por %p164, %p165
      %p167 = scmp.ne.s32.totalorder %s158, %s159
      %p168 = scmp.eq.s32.totalorder %s22, 0
      %p169 = por %p167, %p168
      %p170 = scmp.ne.s32.totalorder %s158, %s159
      %p171 = scmp.eq.s32.totalorder %s23, 9
      %p172 = por %p170, %p171
      %p174 = scmp.ne.s32.totalorder %s159, %s173
      %p175 = scmp.eq.s32.totalorder %s23, 0
      %p176 = por %p174, %p175
      %s178 = sadd.s32 %s177, 1
      %p181 = scmp.eq.s32.totalorder %s17, 9
      %p182 = scmp.ne.s32.totalorder %s177, %s179
      %p183 = scmp.eq.s32.totalorder %s17, 0
      %p184 = por %p182, %p183
      %p185 = scmp.ne.s32.totalorder %s177, %s179
      %p186 = scmp.eq.s32.totalorder %s22, 9
      %p187 = por %p185, %p186
      %p188 = scmp.ne.s32.totalorder %s179, %s180
      %p189 = scmp.eq.s32.totalorder %s22, 0
      %p190 = por %p188, %p189
      %p191 = scmp.ne.s32.totalorder %s179, %s180
      %p192 = scmp.eq.s32.totalorder %s23, 9
      %p193 = por %p191, %p192
      %p195 = scmp.ne.s32.totalorder %s180, %s194
      %p196 = scmp.eq.s32.totalorder %s23, 0
      %p197 = por %p195, %p196
      %p198 = scmp.le.s32.totalorder 1, %s17
      %p199 = scmp.lt.s32.totalorder %s17, 11
      %p200 = pnand %p198, %p199
      %p201 = pneg %p200
      // Predicated region
      $region9: #{tpu_custom_call.1} parent=5 // pred_check
        _
      $region10: #{tpu_custom_call.1} parent=5 // pred_check_branch
        %203 = sbr.rel (%p200) target = $region12
      $region11: #{tpu_custom_call.1} parent=5 // pred_region
        %s204 = ssub.s32 %s17, 1
        // Predicated region
        $region13: #{tpu_custom_call.1} parent=11 // pred_check
          %p205 = pneg %p38
        $region14: #{tpu_custom_call.1} parent=11 // pred_check_branch
          %207 = sbr.rel (%p205) target = $region16
        $region15: #{tpu_custom_call.1} parent=11 // pred_region
          %s209 = ssub.s32 1024, 1024
          %210 = vsyncadd [#allocation3], %s209
          %s212 = sshll.u32 [#allocation2], 4
          %s213 = int_to_ptr.vmem [resolvable:$true] %s212
          %215 = dma.hbm_to_vmem [thread:$0]  %s0, 1024, %s213, [#allocation3]
        $region16: #{tpu_custom_call.1} parent=11 // pred_fallthru
          _
        // Predicated region
        $region17: #{tpu_custom_call.1} parent=11 // pred_check
          %p216 = pneg %p59
        $region18: #{tpu_custom_call.1} parent=11 // pred_check_branch
          %218 = sbr.rel (%p216) target = $region20
        $region19: #{tpu_custom_call.1} parent=11 // pred_region
          %s220 = ssub.s32 1024, 1024
          %221 = vsyncadd [#allocation6], %s220
          %s223 = sshll.u32 [#allocation5], 4
          %s224 = int_to_ptr.vmem [resolvable:$true] %s223
          %226 = dma.hbm_to_vmem [thread:$0]  %s1, 1024, %s224, [#allocation6]
        $region20: #{tpu_custom_call.1} parent=11 // pred_fallthru
          _
        // Predicated region
        $region21: #{tpu_custom_call.1} parent=11 // pred_check
          %p227 = pneg %p106
        $region22: #{tpu_custom_call.1} parent=11 // pred_check_branch
          %229 = sbr.rel (%p227) target = $region24
        $region23: #{tpu_custom_call.1} parent=11 // pred_region
          %s231 = ssub.s32 16384, 16384
          %232 = vsyncadd [#allocation6], %s231
          %s233 = sshll.u32 [#allocation8], 4
          %s234 = int_to_ptr.vmem [resolvable:$true] %s233
          %239 = dma.hbm_to_vmem [thread:$0]  %s3, 16384, %s234, [#allocation6], 128, 128, 8
        $region24: #{tpu_custom_call.1} parent=11 // pred_fallthru
          _
        // Predicated region
        $region25: #{tpu_custom_call.1} parent=11 // pred_check
          %p240 = pneg %p127
        $region26: #{tpu_custom_call.1} parent=11 // pred_check_branch
          %242 = sbr.rel (%p240) target = $region28
        $region27: #{tpu_custom_call.1} parent=11 // pred_region
          %s244 = ssub.s32 16384, 16384
          %245 = vsyncadd [#allocation10], %s244
          %s246 = sshll.u32 [#allocation9], 4
          %s247 = int_to_ptr.vmem [resolvable:$true] %s246
          %252 = dma.hbm_to_vmem [thread:$0]  %s4, 16384, %s247, [#allocation10], 1024, 1024, 64
        $region28: #{tpu_custom_call.1} parent=11 // pred_fallthru
          _
        // Predicated region
        $region29: #{tpu_custom_call.1} parent=11 // pred_check
          %p253 = pneg %p148
        $region30: #{tpu_custom_call.1} parent=11 // pred_check_branch
          %255 = sbr.rel (%p253) target = $region32
        $region31: #{tpu_custom_call.1} parent=11 // pred_region
          _
        $region32: #{tpu_custom_call.1} parent=11 // pred_fallthru
          _
        // Predicated region
        $region33: #{tpu_custom_call.1} parent=11 // pred_check
          %p256 = pneg %p169
        $region34: #{tpu_custom_call.1} parent=11 // pred_check_branch
          %258 = sbr.rel (%p256) target = $region36
        $region35: #{tpu_custom_call.1} parent=11 // pred_region
          _
        $region36: #{tpu_custom_call.1} parent=11 // pred_fallthru
          _
      $region12: #{tpu_custom_call.1} parent=5 // pred_fallthru
        _
      %p259 = scmp.lt.s32.totalorder %s17, 10
      // Predicated region
      $region37: #{tpu_custom_call.1} parent=5 // pred_check
        %p260 = pneg %p259
      $region38: #{tpu_custom_call.1} parent=5 // pred_check_branch
        %262 = sbr.rel (%p260) target = $region40
      $region39: #{tpu_custom_call.1} parent=5 // pred_region
        // Predicated region
        $region41: #{tpu_custom_call.1} parent=39 // pred_check
          %p263 = pneg %p79
        $region42: #{tpu_custom_call.1} parent=39 // pred_check_branch
          %265 = sbr.rel (%p263) target = $region44
        $region43: #{tpu_custom_call.1} parent=39 // pred_region
          %s266 = sand.u32 %s17, 1
          %s267 = scalar_lea.sflag [#allocation3], %s266
          %s268 = sand.u32 %s69, 1
          %s269 = smul.addr %s268, 64
          %s270 = scalar_lea.vmem [#allocation7], %s269
          %s272 = ssub.s32 1024, 1024
          %273 = vsyncadd %s267, %s272
          %s274 = smul.addr %s17, 8
          %s275 = smul.addr %s274, 128
          %s276 = scalar_lea.hbm %s2, %s275
          %s278 = sshll.u32 %s270, 4
          %s279 = int_to_ptr.vmem [resolvable:$true] %s278
          %281 = dma.hbm_to_vmem [thread:$0]  %s276, 1024, %s279, %s267
        $region44: #{tpu_custom_call.1} parent=39 // pred_fallthru
          _
      $region40: #{tpu_custom_call.1} parent=5 // pred_fallthru
        _
      %p282 = scmp.le.s32.totalorder 1, %s17
      %p283 = scmp.lt.s32.totalorder %s17, 11
      %p284 = pnand %p282, %p283
      %p285 = pneg %p284
      // Predicated region
      $region45: #{tpu_custom_call.1} parent=5 // pred_check
        _
      $region46: #{tpu_custom_call.1} parent=5 // pred_check_branch
        %287 = sbr.rel (%p284) target = $region48
      $region47: #{tpu_custom_call.1} parent=5 // pred_region
        %s288 = ssub.s32 %s17, 1
        // Predicated region
        $region49: #{tpu_custom_call.1} parent=47 // pred_check
          %p289 = pneg %p38
        $region50: #{tpu_custom_call.1} parent=47 // pred_check_branch
          %291 = sbr.rel (%p289) target = $region52
        $region51: #{tpu_custom_call.1} parent=47 // pred_region
          %292 = dma.done [#allocation3], 1024
        $region52: #{tpu_custom_call.1} parent=47 // pred_fallthru
          _
        // Predicated region
        $region53: #{tpu_custom_call.1} parent=47 // pred_check
          %p293 = pneg %p59
        $region54: #{tpu_custom_call.1} parent=47 // pred_check_branch
          %295 = sbr.rel (%p293) target = $region56
        $region55: #{tpu_custom_call.1} parent=47 // pred_region
          %296 = dma.done [#allocation6], 1024
        $region56: #{tpu_custom_call.1} parent=47 // pred_fallthru
          _
        %s297 = sand.u32 %s22, 1
        %s298 = scalar_lea.sflag [#allocation3], %s297
        %s299 = sand.u32 %s72, 1
        %s300 = smul.addr %s299, 64
        %s301 = scalar_lea.vmem [#allocation7], %s300
        // Predicated region
        $region57: #{tpu_custom_call.1} parent=47 // pred_check
          %p302 = pneg %p85
        $region58: #{tpu_custom_call.1} parent=47 // pred_check_branch
          %304 = sbr.rel (%p302) target = $region60
        $region59: #{tpu_custom_call.1} parent=47 // pred_region
          %305 = dma.done %s298, 1024
        $region60: #{tpu_custom_call.1} parent=47 // pred_fallthru
          _
        // Predicated region
        $region61: #{tpu_custom_call.1} parent=47 // pred_check
          %p306 = pneg %p106
        $region62: #{tpu_custom_call.1} parent=47 // pred_check_branch
          %308 = sbr.rel (%p306) target = $region64
        $region63: #{tpu_custom_call.1} parent=47 // pred_region
          %309 = dma.done [#allocation6], 16384
        $region64: #{tpu_custom_call.1} parent=47 // pred_fallthru
          _
        // Predicated region
        $region65: #{tpu_custom_call.1} parent=47 // pred_check
          %p310 = pneg %p127
        $region66: #{tpu_custom_call.1} parent=47 // pred_check_branch
          %312 = sbr.rel (%p310) target = $region68
        $region67: #{tpu_custom_call.1} parent=47 // pred_region
          %313 = dma.done [#allocation10], 16384
        $region68: #{tpu_custom_call.1} parent=47 // pred_fallthru
          _
        %p314 = pneg %p38
        %p315 = pneg %p35
        %p316 = pneg %p59
        %p317 = pneg %p56
        %s318 = sand.u32 %s22, 1
        %s319 = scalar_lea.sflag [#allocation3], %s318
        %s320 = sand.u32 %s72, 1
        %s321 = smul.addr %s320, 64
        %s322 = scalar_lea.vmem [#allocation7], %s321
        %p323 = pneg %p85
        %p324 = pneg %p82
        %p325 = pneg %p106
        %p326 = pneg %p103
        %p327 = pneg %p127
        %p328 = pneg %p124
        %p329 = pneg %p148
        %p330 = pneg %p145
        %p331 = pneg %p169
        %p332 = pneg %p166
        %p333 = pneg %p190
        %p334 = pneg %p187
        %p335 = scmp.eq.s32.totalorder %s22, 0
        // Predicated region
        $region69: #{tpu_custom_call.1} parent=47 // pred_check
          %p336 = pneg %p335
        $region70: #{tpu_custom_call.1} parent=47 // pred_check_branch
          %338 = sbr.rel (%p336) target = $region72
        $region71: #{tpu_custom_call.1} parent=47 // pred_region
          %v339 = vld [vmem:[#allocation5] sm:$0xff]
          %v340 = vld [vmem:[#allocation5 + $0x8] sm:$0xff]
          %v341 = vld [vmem:[#allocation5 + $0x10] sm:$0xff]
          %v342 = vld [vmem:[#allocation5 + $0x18] sm:$0xff]
          %v343 = vld [vmem:[#allocation5 + $0x20] sm:$0xff]
          %v344 = vld [vmem:[#allocation5 + $0x28] sm:$0xff]
          %v345 = vld [vmem:[#allocation5 + $0x30] sm:$0xff]
          %v346 = vld [vmem:[#allocation5 + $0x38] sm:$0xff]
          %347 = vst [vmem:[#allocation11] sm:$0xff] %v339
          %348 = vst [vmem:[#allocation11 + $0x8] sm:$0xff] %v340
          %349 = vst [vmem:[#allocation11 + $0x10] sm:$0xff] %v341
          %350 = vst [vmem:[#allocation11 + $0x18] sm:$0xff] %v342
          %351 = vst [vmem:[#allocation11 + $0x20] sm:$0xff] %v343
          %352 = vst [vmem:[#allocation11 + $0x28] sm:$0xff] %v344
          %353 = vst [vmem:[#allocation11 + $0x30] sm:$0xff] %v345
          %354 = vst [vmem:[#allocation11 + $0x38] sm:$0xff] %v346
        $region72: #{tpu_custom_call.1} parent=47 // pred_fallthru
          _
        %v355 = vld [vmem:[#allocation11] sm:$0xff]
        %v356 = vld [vmem:[#allocation11 + $0x8] sm:$0xff]
        %v357 = vld [vmem:[#allocation11 + $0x10] sm:$0xff]
        %v358 = vld [vmem:[#allocation11 + $0x18] sm:$0xff]
        %v359 = vld [vmem:[#allocation11 + $0x20] sm:$0xff]
        %v360 = vld [vmem:[#allocation11 + $0x28] sm:$0xff]
        %v361 = vld [vmem:[#allocation11 + $0x30] sm:$0xff]
        %v362 = vld [vmem:[#allocation11 + $0x38] sm:$0xff]
        %v363 = vld [vmem:[#allocation2] sm:$0xff]
        %v364 = vld [vmem:[#allocation2 + $0x8] sm:$0xff]
        %v365 = vld [vmem:[#allocation2 + $0x10] sm:$0xff]
        %v366 = vld [vmem:[#allocation2 + $0x18] sm:$0xff]
        %v367 = vld [vmem:[#allocation2 + $0x20] sm:$0xff]
        %v368 = vld [vmem:[#allocation2 + $0x28] sm:$0xff]
        %v369 = vld [vmem:[#allocation2 + $0x30] sm:$0xff]
        %v370 = vld [vmem:[#allocation2 + $0x38] sm:$0xff]
        %v371 = vld [vmem:[#allocation8] sm:$0xff]
        %v372 = vld [vmem:[#allocation8 + $0x8] sm:$0xff]
        %v373 = vld [vmem:[#allocation8 + $0x10] sm:$0xff]
        %v374 = vld [vmem:[#allocation8 + $0x18] sm:$0xff]
        %v375 = vld [vmem:[#allocation8 + $0x20] sm:$0xff]
        %v376 = vld [vmem:[#allocation8 + $0x28] sm:$0xff]
        %v377 = vld [vmem:[#allocation8 + $0x30] sm:$0xff]
        %v378 = vld [vmem:[#allocation8 + $0x38] sm:$0xff]
        %v379 = vld [vmem:[#allocation8 + $0x40] sm:$0xff]
        %v380 = vld [vmem:[#allocation8 + $0x48] sm:$0xff]
        %v381 = vld [vmem:[#allocation8 + $0x50] sm:$0xff]
        %v382 = vld [vmem:[#allocation8 + $0x58] sm:$0xff]
        %v383 = vld [vmem:[#allocation8 + $0x60] sm:$0xff]
        %v384 = vld [vmem:[#allocation8 + $0x68] sm:$0xff]
        %v385 = vld [vmem:[#allocation8 + $0x70] sm:$0xff]
        %v386 = vld [vmem:[#allocation8 + $0x78] sm:$0xff]
        %v387 = vld [vmem:[#allocation8 + $0x80] sm:$0xff]
        %v388 = vld [vmem:[#allocation8 + $0x88] sm:$0xff]
        %v389 = vld [vmem:[#allocation8 + $0x90] sm:$0xff]
        %v390 = vld [vmem:[#allocation8 + $0x98] sm:$0xff]
        %v391 = vld [vmem:[#allocation8 + $0xa0] sm:$0xff]
        %v392 = vld [vmem:[#allocation8 + $0xa8] sm:$0xff]
        %v393 = vld [vmem:[#allocation8 + $0xb0] sm:$0xff]
        %v394 = vld [vmem:[#allocation8 + $0xb8] sm:$0xff]
        %v395 = vld [vmem:[#allocation8 + $0xc0] sm:$0xff]
        %v396 = vld [vmem:[#allocation8 + $0xc8] sm:$0xff]
        %v397 = vld [vmem:[#allocation8 + $0xd0] sm:$0xff]
        %v398 = vld [vmem:[#allocation8 + $0xd8] sm:$0xff]
        %v399 = vld [vmem:[#allocation8 + $0xe0] sm:$0xff]
        %v400 = vld [vmem:[#allocation8 + $0xe8] sm:$0xff]
        %v401 = vld [vmem:[#allocation8 + $0xf0] sm:$0xff]
        %v402 = vld [vmem:[#allocation8 + $0xf8] sm:$0xff]
        %v403 = vld [vmem:[#allocation8 + $0x100] sm:$0xff]
        %v404 = vld [vmem:[#allocation8 + $0x108] sm:$0xff]
        %v405 = vld [vmem:[#allocation8 + $0x110] sm:$0xff]
        %v406 = vld [vmem:[#allocation8 + $0x118] sm:$0xff]
        %v407 = vld [vmem:[#allocation8 + $0x120] sm:$0xff]
        %v408 = vld [vmem:[#allocation8 + $0x128] sm:$0xff]
        %v409 = vld [vmem:[#allocation8 + $0x130] sm:$0xff]
        %v410 = vld [vmem:[#allocation8 + $0x138] sm:$0xff]
        %v411 = vld [vmem:[#allocation8 + $0x140] sm:$0xff]
        %v412 = vld [vmem:[#allocation8 + $0x148] sm:$0xff]
        %v413 = vld [vmem:[#allocation8 + $0x150] sm:$0xff]
        %v414 = vld [vmem:[#allocation8 + $0x158] sm:$0xff]
        %v415 = vld [vmem:[#allocation8 + $0x160] sm:$0xff]
        %v416 = vld [vmem:[#allocation8 + $0x168] sm:$0xff]
        %v417 = vld [vmem:[#allocation8 + $0x170] sm:$0xff]
        %v418 = vld [vmem:[#allocation8 + $0x178] sm:$0xff]
        %v419 = vld [vmem:[#allocation8 + $0x180] sm:$0xff]
        %v420 = vld [vmem:[#allocation8 + $0x188] sm:$0xff]
        %v421 = vld [vmem:[#allocation8 + $0x190] sm:$0xff]
        %v422 = vld [vmem:[#allocation8 + $0x198] sm:$0xff]
        %v423 = vld [vmem:[#allocation8 + $0x1a0] sm:$0xff]
        %v424 = vld [vmem:[#allocation8 + $0x1a8] sm:$0xff]
        %v425 = vld [vmem:[#allocation8 + $0x1b0] sm:$0xff]
        %v426 = vld [vmem:[#allocation8 + $0x1b8] sm:$0xff]
        %v427 = vld [vmem:[#allocation8 + $0x1c0] sm:$0xff]
        %v428 = vld [vmem:[#allocation8 + $0x1c8] sm:$0xff]
        %v429 = vld [vmem:[#allocation8 + $0x1d0] sm:$0xff]
        %v430 = vld [vmem:[#allocation8 + $0x1d8] sm:$0xff]
        %v431 = vld [vmem:[#allocation8 + $0x1e0] sm:$0xff]
        %v432 = vld [vmem:[#allocation8 + $0x1e8] sm:$0xff]
        %v433 = vld [vmem:[#allocation8 + $0x1f0] sm:$0xff]
        %v434 = vld [vmem:[#allocation8 + $0x1f8] sm:$0xff]
        %v435 = vld [vmem:[#allocation8 + $0x200] sm:$0xff]
        %v436 = vld [vmem:[#allocation8 + $0x208] sm:$0xff]
        %v437 = vld [vmem:[#allocation8 + $0x210] sm:$0xff]
        %v438 = vld [vmem:[#allocation8 + $0x218] sm:$0xff]
        %v439 = vld [vmem:[#allocation8 + $0x220] sm:$0xff]
        %v440 = vld [vmem:[#allocation8 + $0x228] sm:$0xff]
        %v441 = vld [vmem:[#allocation8 + $0x230] sm:$0xff]
        %v442 = vld [vmem:[#allocation8 + $0x238] sm:$0xff]
        %v443 = vld [vmem:[#allocation8 + $0x240] sm:$0xff]
        %v444 = vld [vmem:[#allocation8 + $0x248] sm:$0xff]
        %v445 = vld [vmem:[#allocation8 + $0x250] sm:$0xff]
        %v446 = vld [vmem:[#allocation8 + $0x258] sm:$0xff]
        %v447 = vld [vmem:[#allocation8 + $0x260] sm:$0xff]
        %v448 = vld [vmem:[#allocation8 + $0x268] sm:$0xff]
        %v449 = vld [vmem:[#allocation8 + $0x270] sm:$0xff]
        %v450 = vld [vmem:[#allocation8 + $0x278] sm:$0xff]
        %v451 = vld [vmem:[#allocation8 + $0x280] sm:$0xff]
        %v452 = vld [vmem:[#allocation8 + $0x288] sm:$0xff]
        %v453 = vld [vmem:[#allocation8 + $0x290] sm:$0xff]
        %v454 = vld [vmem:[#allocation8 + $0x298] sm:$0xff]
        %v455 = vld [vmem:[#allocation8 + $0x2a0] sm:$0xff]
        %v456 = vld [vmem:[#allocation8 + $0x2a8] sm:$0xff]
        %v457 = vld [vmem:[#allocation8 + $0x2b0] sm:$0xff]
        %v458 = vld [vmem:[#allocation8 + $0x2b8] sm:$0xff]
        %v459 = vld [vmem:[#allocation8 + $0x2c0] sm:$0xff]
        %v460 = vld [vmem:[#allocation8 + $0x2c8] sm:$0xff]
        %v461 = vld [vmem:[#allocation8 + $0x2d0] sm:$0xff]
        %v462 = vld [vmem:[#allocation8 + $0x2d8] sm:$0xff]
        %v463 = vld [vmem:[#allocation8 + $0x2e0] sm:$0xff]
        %v464 = vld [vmem:[#allocation8 + $0x2e8] sm:$0xff]
        %v465 = vld [vmem:[#allocation8 + $0x2f0] sm:$0xff]
        %v466 = vld [vmem:[#allocation8 + $0x2f8] sm:$0xff]
        %v467 = vld [vmem:[#allocation8 + $0x300] sm:$0xff]
        %v468 = vld [vmem:[#allocation8 + $0x308] sm:$0xff]
        %v469 = vld [vmem:[#allocation8 + $0x310] sm:$0xff]
        %v470 = vld [vmem:[#allocation8 + $0x318] sm:$0xff]
        %v471 = vld [vmem:[#allocation8 + $0x320] sm:$0xff]
        %v472 = vld [vmem:[#allocation8 + $0x328] sm:$0xff]
        %v473 = vld [vmem:[#allocation8 + $0x330] sm:$0xff]
        %v474 = vld [vmem:[#allocation8 + $0x338] sm:$0xff]
        %v475 = vld [vmem:[#allocation8 + $0x340] sm:$0xff]
        %v476 = vld [vmem:[#allocation8 + $0x348] sm:$0xff]
        %v477 = vld [vmem:[#allocation8 + $0x350] sm:$0xff]
        %v478 = vld [vmem:[#allocation8 + $0x358] sm:$0xff]
        %v479 = vld [vmem:[#allocation8 + $0x360] sm:$0xff]
        %v480 = vld [vmem:[#allocation8 + $0x368] sm:$0xff]
        %v481 = vld [vmem:[#allocation8 + $0x370] sm:$0xff]
        %v482 = vld [vmem:[#allocation8 + $0x378] sm:$0xff]
        %v483 = vld [vmem:[#allocation8 + $0x380] sm:$0xff]
        %v484 = vld [vmem:[#allocation8 + $0x388] sm:$0xff]
        %v485 = vld [vmem:[#allocation8 + $0x390] sm:$0xff]
        %v486 = vld [vmem:[#allocation8 + $0x398] sm:$0xff]
        %v487 = vld [vmem:[#allocation8 + $0x3a0] sm:$0xff]
        %v488 = vld [vmem:[#allocation8 + $0x3a8] sm:$0xff]
        %v489 = vld [vmem:[#allocation8 + $0x3b0] sm:$0xff]
        %v490 = vld [vmem:[#allocation8 + $0x3b8] sm:$0xff]
        %v491 = vld [vmem:[#allocation8 + $0x3c0] sm:$0xff]
        %v492 = vld [vmem:[#allocation8 + $0x3c8] sm:$0xff]
        %v493 = vld [vmem:[#allocation8 + $0x3d0] sm:$0xff]
        %v494 = vld [vmem:[#allocation8 + $0x3d8] sm:$0xff]
        %v495 = vld [vmem:[#allocation8 + $0x3e0] sm:$0xff]
        %v496 = vld [vmem:[#allocation8 + $0x3e8] sm:$0xff]
        %v497 = vld [vmem:[#allocation8 + $0x3f0] sm:$0xff]
        %v498 = vld [vmem:[#allocation8 + $0x3f8] sm:$0xff]
        %v499 = vld [vmem:[%s5] sm:$0xff]
        %500 = vmatprep.subr.mxu0 0.0
        %501 = vmatpush1.msra.mxu0 %v371
        %502 = vmatprep.subr.mxu0 0.0
        %503 = vmatpush1.msra.mxu0 %v372
        %504 = vmatprep.subr.mxu0 0.0
        %505 = vmatpush1.msra.mxu0 %v373
        %506 = vmatprep.subr.mxu0 0.0
        %507 = vmatpush1.msra.mxu0 %v374
        %508 = vmatprep.subr.mxu0 0.0
        %509 = vmatpush1.msra.mxu0 %v375
        %510 = vmatprep.subr.mxu0 0.0
        %511 = vmatpush1.msra.mxu0 %v376
        %512 = vmatprep.subr.mxu0 0.0
        %513 = vmatpush1.msra.mxu0 %v377
        %514 = vmatprep.subr.mxu0 0.0
        %515 = vmatpush1.msra.mxu0 %v378
        %516 = vmatprep.subr.mxu0 0.0
        %517 = vmatpush1.msra.mxu0 %v379
        %518 = vmatprep.subr.mxu0 0.0
        %519 = vmatpush1.msra.mxu0 %v380
        %520 = vmatprep.subr.mxu0 0.0
        %521 = vmatpush1.msra.mxu0 %v381
        %522 = vmatprep.subr.mxu0 0.0
        %523 = vmatpush1.msra.mxu0 %v382
        %524 = vmatprep.subr.mxu0 0.0
        %525 = vmatpush1.msra.mxu0 %v383
        %526 = vmatprep.subr.mxu0 0.0
        %527 = vmatpush1.msra.mxu0 %v384
        %528 = vmatprep.subr.mxu0 0.0
        %529 = vmatpush1.msra.mxu0 %v385
        %530 = vmatprep.subr.mxu0 0.0
        %531 = vmatpush1.msra.mxu0 %v386
        %532 = vmatprep.subr.mxu0 0.0
        %533 = vmatpush1.msra.mxu0 %v387
        %534 = vmatprep.subr.mxu0 0.0
        %535 = vmatpush1.msra.mxu0 %v388
        %536 = vmatprep.subr.mxu0 0.0
        %537 = vmatpush1.msra.mxu0 %v389
        %538 = vmatprep.subr.mxu0 0.0
        %539 = vmatpush1.msra.mxu0 %v390
        %540 = vmatprep.subr.mxu0 0.0
        %541 = vmatpush1.msra.mxu0 %v391
        %542 = vmatprep.subr.mxu0 0.0
        %543 = vmatpush1.msra.mxu0 %v392
        %544 = vmatprep.subr.mxu0 0.0
        %545 = vmatpush1.msra.mxu0 %v393
        %546 = vmatprep.subr.mxu0 0.0
        %547 = vmatpush1.msra.mxu0 %v394
        %548 = vmatprep.subr.mxu0 0.0
        %549 = vmatpush1.msra.mxu0 %v395
        %550 = vmatprep.subr.mxu0 0.0
        %551 = vmatpush1.msra.mxu0 %v396
        %552 = vmatprep.subr.mxu0 0.0
        %553 = vmatpush1.msra.mxu0 %v397
        %554 = vmatprep.subr.mxu0 0.0
        %555 = vmatpush1.msra.mxu0 %v398
        %556 = vmatprep.subr.mxu0 0.0
        %557 = vmatpush1.msra.mxu0 %v399
        %558 = vmatprep.subr.mxu0 0.0
        %559 = vmatpush1.msra.mxu0 %v400
        %560 = vmatprep.subr.mxu0 0.0
        %561 = vmatpush1.msra.mxu0 %v401
        %562 = vmatprep.subr.mxu0 0.0
        %563 = vmatpush1.msra.mxu0 %v402
        %564 = vmatprep.mubr.f32.mxu0 %v356
        %565 = vmatmul.mubr.f32.gmra.mrb[0].mxu0 %v355
        %v566 = vpop.f32.mrb[0].mxu0
        %v567 = vadd.f32 %v499, %v566
        %v568 = vpop.f32.mrb[0].mxu0
        %569 = vdwg.mxu0
        %570 = vmatprep.subr.mxu0 0.0
        %571 = vmatpush1.msra.mxu0 %v403
        %572 = vmatprep.subr.mxu0 0.0
        %573 = vmatpush1.msra.mxu0 %v404
        %574 = vmatprep.subr.mxu0 0.0
        %575 = vmatpush1.msra.mxu0 %v405
        %576 = vmatprep.subr.mxu0 0.0
        %577 = vmatpush1.msra.mxu0 %v406
        %578 = vmatprep.subr.mxu0 0.0
        %579 = vmatpush1.msra.mxu0 %v407
        %580 = vmatprep.subr.mxu0 0.0
        %581 = vmatpush1.msra.mxu0 %v408
        %582 = vmatprep.subr.mxu0 0.0
        %583 = vmatpush1.msra.mxu0 %v409
        %584 = vmatprep.subr.mxu0 0.0
        %585 = vmatpush1.msra.mxu0 %v410
        %586 = vmatprep.subr.mxu0 0.0
        %587 = vmatpush1.msra.mxu0 %v411
        %588 = vmatprep.subr.mxu0 0.0
        %589 = vmatpush1.msra.mxu0 %v412
        %590 = vmatprep.subr.mxu0 0.0
        %591 = vmatpush1.msra.mxu0 %v413
        %592 = vmatprep.subr.mxu0 0.0
        %593 = vmatpush1.msra.mxu0 %v414
        %594 = vmatprep.subr.mxu0 0.0
        %595 = vmatpush1.msra.mxu0 %v415
        %596 = vmatprep.subr.mxu0 0.0
        %597 = vmatpush1.msra.mxu0 %v416
        %598 = vmatprep.subr.mxu0 0.0
        %599 = vmatpush1.msra.mxu0 %v417
        %600 = vmatprep.subr.mxu0 0.0
        %601 = vmatpush1.msra.mxu0 %v418
        %602 = vmatprep.subr.mxu0 0.0
        %603 = vmatpush1.msra.mxu0 %v419
        %604 = vmatprep.subr.mxu0 0.0
        %605 = vmatpush1.msra.mxu0 %v420
        %606 = vmatprep.subr.mxu0 0.0
        %607 = vmatpush1.msra.mxu0 %v421
        %608 = vmatprep.subr.mxu0 0.0
        %609 = vmatpush1.msra.mxu0 %v422
        %610 = vmatprep.subr.mxu0 0.0
        %611 = vmatpush1.msra.mxu0 %v423
        %612 = vmatprep.subr.mxu0 0.0
        %613 = vmatpush1.msra.mxu0 %v424
        %614 = vmatprep.subr.mxu0 0.0
        %615 = vmatpush1.msra.mxu0 %v425
        %616 = vmatprep.subr.mxu0 0.0
        %617 = vmatpush1.msra.mxu0 %v426
        %618 = vmatprep.subr.mxu0 0.0
        %619 = vmatpush1.msra.mxu0 %v427
        %620 = vmatprep.subr.mxu0 0.0
        %621 = vmatpush1.msra.mxu0 %v428
        %622 = vmatprep.subr.mxu0 0.0
        %623 = vmatpush1.msra.mxu0 %v429
        %624 = vmatprep.subr.mxu0 0.0
        %625 = vmatpush1.msra.mxu0 %v430
        %626 = vmatprep.subr.mxu0 0.0
        %627 = vmatpush1.msra.mxu0 %v431
        %628 = vmatprep.subr.mxu0 0.0
        %629 = vmatpush1.msra.mxu0 %v432
        %630 = vmatprep.subr.mxu0 0.0
        %631 = vmatpush1.msra.mxu0 %v433
        %632 = vmatprep.subr.mxu0 0.0
        %633 = vmatpush1.msra.mxu0 %v434
        %634 = vmatprep.mubr.f32.mxu0 %v358
        %635 = vmatmul.mubr.f32.gmra.mrb[0].mxu0 %v357
        %v636 = vpop.f32.mrb[0].mxu0
        %v637 = vadd.f32 %v567, %v636
        %v638 = vpop.f32.mrb[0].mxu0
        %639 = vdwg.mxu0
        %640 = vmatprep.subr.mxu0 0.0
        %641 = vmatpush1.msra.mxu0 %v435
        %642 = vmatprep.subr.mxu0 0.0
        %643 = vmatpush1.msra.mxu0 %v436
        %644 = vmatprep.subr.mxu0 0.0
        %645 = vmatpush1.msra.mxu0 %v437
        %646 = vmatprep.subr.mxu0 0.0
        %647 = vmatpush1.msra.mxu0 %v438
        %648 = vmatprep.subr.mxu0 0.0
        %649 = vmatpush1.msra.mxu0 %v439
        %650 = vmatprep.subr.mxu0 0.0
        %651 = vmatpush1.msra.mxu0 %v440
        %652 = vmatprep.subr.mxu0 0.0
        %653 = vmatpush1.msra.mxu0 %v441
        %654 = vmatprep.subr.mxu0 0.0
        %655 = vmatpush1.msra.mxu0 %v442
        %656 = vmatprep.subr.mxu0 0.0
        %657 = vmatpush1.msra.mxu0 %v443
        %658 = vmatprep.subr.mxu0 0.0
        %659 = vmatpush1.msra.mxu0 %v444
        %660 = vmatprep.subr.mxu0 0.0
        %661 = vmatpush1.msra.mxu0 %v445
        %662 = vmatprep.subr.mxu0 0.0
        %663 = vmatpush1.msra.mxu0 %v446
        %664 = vmatprep.subr.mxu0 0.0
        %665 = vmatpush1.msra.mxu0 %v447
        %666 = vmatprep.subr.mxu0 0.0
        %667 = vmatpush1.msra.mxu0 %v448
        %668 = vmatprep.subr.mxu0 0.0
        %669 = vmatpush1.msra.mxu0 %v449
        %670 = vmatprep.subr.mxu0 0.0
        %671 = vmatpush1.msra.mxu0 %v450
        %672 = vmatprep.subr.mxu0 0.0
        %673 = vmatpush1.msra.mxu0 %v451
        %674 = vmatprep.subr.mxu0 0.0
        %675 = vmatpush1.msra.mxu0 %v452
        %676 = vmatprep.subr.mxu0 0.0
        %677 = vmatpush1.msra.mxu0 %v453
        %678 = vmatprep.subr.mxu0 0.0
        %679 = vmatpush1.msra.mxu0 %v454
        %680 = vmatprep.subr.mxu0 0.0
        %681 = vmatpush1.msra.mxu0 %v455
        %682 = vmatprep.subr.mxu0 0.0
        %683 = vmatpush1.msra.mxu0 %v456
        %684 = vmatprep.subr.mxu0 0.0
        %685 = vmatpush1.msra.mxu0 %v457
        %686 = vmatprep.subr.mxu0 0.0
        %687 = vmatpush1.msra.mxu0 %v458
        %688 = vmatprep.subr.mxu0 0.0
        %689 = vmatpush1.msra.mxu0 %v459
        %690 = vmatprep.subr.mxu0 0.0
        %691 = vmatpush1.msra.mxu0 %v460
        %692 = vmatprep.subr.mxu0 0.0
        %693 = vmatpush1.msra.mxu0 %v461
        %694 = vmatprep.subr.mxu0 0.0
        %695 = vmatpush1.msra.mxu0 %v462
        %696 = vmatprep.subr.mxu0 0.0
        %697 = vmatpush1.msra.mxu0 %v463
        %698 = vmatprep.subr.mxu0 0.0
        %699 = vmatpush1.msra.mxu0 %v464
        %700 = vmatprep.subr.mxu0 0.0
        %701 = vmatpush1.msra.mxu0 %v465
        %702 = vmatprep.subr.mxu0 0.0
        %703 = vmatpush1.msra.mxu0 %v466
        %704 = vmatprep.mubr.f32.mxu0 %v360
        %705 = vmatmul.mubr.f32.gmra.mrb[0].mxu0 %v359
        %v706 = vpop.f32.mrb[0].mxu0
        %v707 = vadd.f32 %v637, %v706
        %v708 = vpop.f32.mrb[0].mxu0
        %709 = vdwg.mxu0
        %710 = vmatprep.subr.mxu0 0.0
        %711 = vmatpush1.msra.mxu0 %v467
        %712 = vmatprep.subr.mxu0 0.0
        %713 = vmatpush1.msra.mxu0 %v468
        %714 = vmatprep.subr.mxu0 0.0
        %715 = vmatpush1.msra.mxu0 %v469
        %716 = vmatprep.subr.mxu0 0.0
        %717 = vmatpush1.msra.mxu0 %v470
        %718 = vmatprep.subr.mxu0 0.0
        %719 = vmatpush1.msra.mxu0 %v471
        %720 = vmatprep.subr.mxu0 0.0
        %721 = vmatpush1.msra.mxu0 %v472
        %722 = vmatprep.subr.mxu0 0.0
        %723 = vmatpush1.msra.mxu0 %v473
        %724 = vmatprep.subr.mxu0 0.0
        %725 = vmatpush1.msra.mxu0 %v474
        %726 = vmatprep.subr.mxu0 0.0
        %727 = vmatpush1.msra.mxu0 %v475
        %728 = vmatprep.subr.mxu0 0.0
        %729 = vmatpush1.msra.mxu0 %v476
        %730 = vmatprep.subr.mxu0 0.0
        %731 = vmatpush1.msra.mxu0 %v477
        %732 = vmatprep.subr.mxu0 0.0
        %733 = vmatpush1.msra.mxu0 %v478
        %734 = vmatprep.subr.mxu0 0.0
        %735 = vmatpush1.msra.mxu0 %v479
        %736 = vmatprep.subr.mxu0 0.0
        %737 = vmatpush1.msra.mxu0 %v480
        %738 = vmatprep.subr.mxu0 0.0
        %739 = vmatpush1.msra.mxu0 %v481
        %740 = vmatprep.subr.mxu0 0.0
        %741 = vmatpush1.msra.mxu0 %v482
        %742 = vmatprep.subr.mxu0 0.0
        %743 = vmatpush1.msra.mxu0 %v483
        %744 = vmatprep.subr.mxu0 0.0
        %745 = vmatpush1.msra.mxu0 %v484
        %746 = vmatprep.subr.mxu0 0.0
        %747 = vmatpush1.msra.mxu0 %v485
        %748 = vmatprep.subr.mxu0 0.0
        %749 = vmatpush1.msra.mxu0 %v486
        %750 = vmatprep.subr.mxu0 0.0
        %751 = vmatpush1.msra.mxu0 %v487
        %752 = vmatprep.subr.mxu0 0.0
        %753 = vmatpush1.msra.mxu0 %v488
        %754 = vmatprep.subr.mxu0 0.0
        %755 = vmatpush1.msra.mxu0 %v489
        %756 = vmatprep.subr.mxu0 0.0
        %757 = vmatpush1.msra.mxu0 %v490
        %758 = vmatprep.subr.mxu0 0.0
        %759 = vmatpush1.msra.mxu0 %v491
        %760 = vmatprep.subr.mxu0 0.0
        %761 = vmatpush1.msra.mxu0 %v492
        %762 = vmatprep.subr.mxu0 0.0
        %763 = vmatpush1.msra.mxu0 %v493
        %764 = vmatprep.subr.mxu0 0.0
        %765 = vmatpush1.msra.mxu0 %v494
        %766 = vmatprep.subr.mxu0 0.0
        %767 = vmatpush1.msra.mxu0 %v495
        %768 = vmatprep.subr.mxu0 0.0
        %769 = vmatpush1.msra.mxu0 %v496
        %770 = vmatprep.subr.mxu0 0.0
        %771 = vmatpush1.msra.mxu0 %v497
        %772 = vmatprep.subr.mxu0 0.0
        %773 = vmatpush1.msra.mxu0 %v498
        %774 = vmatprep.mubr.f32.mxu0 %v362
        %775 = vmatmul.mubr.f32.gmra.mrb[0].mxu0 %v361
        %v776 = vpop.f32.mrb[0].mxu0
        %v777 = vadd.f32 %v707, %v776
        %v778 = vpop.f32.mrb[0].mxu0
        %779 = vdwg.mxu0
        %v780 = vtanh.pop %v777
        %v781 = vmul.f32 %v780, %v780
        %v782 = vsub.f32 1.0, %v781
        %v783 = vld [vmem:[%s6] sm:$0xff]
        %v784 = vmul.f32 %v782, %v783
        %v785 = vld [vmem:[#allocation9] sm:$0xff]
        %v786 = vld [vmem:[#allocation9 + $0x8] sm:$0xff]
        %v787 = vld [vmem:[#allocation9 + $0x10] sm:$0xff]
        %v788 = vld [vmem:[#allocation9 + $0x18] sm:$0xff]
        %v789 = vld [vmem:[#allocation9 + $0x20] sm:$0xff]
        %v790 = vld [vmem:[#allocation9 + $0x28] sm:$0xff]
        %v791 = vld [vmem:[#allocation9 + $0x30] sm:$0xff]
        %v792 = vld [vmem:[#allocation9 + $0x38] sm:$0xff]
        %v793 = vld [vmem:[#allocation9 + $0x40] sm:$0xff]
        %v794 = vld [vmem:[#allocation9 + $0x48] sm:$0xff]
        %v795 = vld [vmem:[#allocation9 + $0x50] sm:$0xff]
        %v796 = vld [vmem:[#allocation9 + $0x58] sm:$0xff]
        %v797 = vld [vmem:[#allocation9 + $0x60] sm:$0xff]
        %v798 = vld [vmem:[#allocation9 + $0x68] sm:$0xff]
        %v799 = vld [vmem:[#allocation9 + $0x70] sm:$0xff]
        %v800 = vld [vmem:[#allocation9 + $0x78] sm:$0xff]
        %v801 = vld [vmem:[#allocation9 + $0x80] sm:$0xff]
        %v802 = vld [vmem:[#allocation9 + $0x88] sm:$0xff]
        %v803 = vld [vmem:[#allocation9 + $0x90] sm:$0xff]
        %v804 = vld [vmem:[#allocation9 + $0x98] sm:$0xff]
        %v805 = vld [vmem:[#allocation9 + $0xa0] sm:$0xff]
        %v806 = vld [vmem:[#allocation9 + $0xa8] sm:$0xff]
        %v807 = vld [vmem:[#allocation9 + $0xb0] sm:$0xff]
        %v808 = vld [vmem:[#allocation9 + $0xb8] sm:$0xff]
        %v809 = vld [vmem:[#allocation9 + $0xc0] sm:$0xff]
        %v810 = vld [vmem:[#allocation9 + $0xc8] sm:$0xff]
        %v811 = vld [vmem:[#allocation9 + $0xd0] sm:$0xff]
        %v812 = vld [vmem:[#allocation9 + $0xd8] sm:$0xff]
        %v813 = vld [vmem:[#allocation9 + $0xe0] sm:$0xff]
        %v814 = vld [vmem:[#allocation9 + $0xe8] sm:$0xff]
        %v815 = vld [vmem:[#allocation9 + $0xf0] sm:$0xff]
        %v816 = vld [vmem:[#allocation9 + $0xf8] sm:$0xff]
        %v817 = vld [vmem:[#allocation9 + $0x100] sm:$0xff]
        %v818 = vld [vmem:[#allocation9 + $0x108] sm:$0xff]
        %v819 = vld [vmem:[#allocation9 + $0x110] sm:$0xff]
        %v820 = vld [vmem:[#allocation9 + $0x118] sm:$0xff]
        %v821 = vld [vmem:[#allocation9 + $0x120] sm:$0xff]
        %v822 = vld [vmem:[#allocation9 + $0x128] sm:$0xff]
        %v823 = vld [vmem:[#allocation9 + $0x130] sm:$0xff]
        %v824 = vld [vmem:[#allocation9 + $0x138] sm:$0xff]
        %v825 = vld [vmem:[#allocation9 + $0x140] sm:$0xff]
        %v826 = vld [vmem:[#allocation9 + $0x148] sm:$0xff]
        %v827 = vld [vmem:[#allocation9 + $0x150] sm:$0xff]
        %v828 = vld [vmem:[#allocation9 + $0x158] sm:$0xff]
        %v829 = vld [vmem:[#allocation9 + $0x160] sm:$0xff]
        %v830 = vld [vmem:[#allocation9 + $0x168] sm:$0xff]
        %v831 = vld [vmem:[#allocation9 + $0x170] sm:$0xff]
        %v832 = vld [vmem:[#allocation9 + $0x178] sm:$0xff]
        %v833 = vld [vmem:[#allocation9 + $0x180] sm:$0xff]
        %v834 = vld [vmem:[#allocation9 + $0x188] sm:$0xff]
        %v835 = vld [vmem:[#allocation9 + $0x190] sm:$0xff]
        %v836 = vld [vmem:[#allocation9 + $0x198] sm:$0xff]
        %v837 = vld [vmem:[#allocation9 + $0x1a0] sm:$0xff]
        %v838 = vld [vmem:[#allocation9 + $0x1a8] sm:$0xff]
        %v839 = vld [vmem:[#allocation9 + $0x1b0] sm:$0xff]
        %v840 = vld [vmem:[#allocation9 + $0x1b8] sm:$0xff]
        %v841 = vld [vmem:[#allocation9 + $0x1c0] sm:$0xff]
        %v842 = vld [vmem:[#allocation9 + $0x1c8] sm:$0xff]
        %v843 = vld [vmem:[#allocation9 + $0x1d0] sm:$0xff]
        %v844 = vld [vmem:[#allocation9 + $0x1d8] sm:$0xff]
        %v845 = vld [vmem:[#allocation9 + $0x1e0] sm:$0xff]
        %v846 = vld [vmem:[#allocation9 + $0x1e8] sm:$0xff]
        %v847 = vld [vmem:[#allocation9 + $0x1f0] sm:$0xff]
        %v848 = vld [vmem:[#allocation9 + $0x1f8] sm:$0xff]
        %v849 = vld [vmem:[#allocation9 + $0x200] sm:$0xff]
        %v850 = vld [vmem:[#allocation9 + $0x208] sm:$0xff]
        %v851 = vld [vmem:[#allocation9 + $0x210] sm:$0xff]
        %v852 = vld [vmem:[#allocation9 + $0x218] sm:$0xff]
        %v853 = vld [vmem:[#allocation9 + $0x220] sm:$0xff]
        %v854 = vld [vmem:[#allocation9 + $0x228] sm:$0xff]
        %v855 = vld [vmem:[#allocation9 + $0x230] sm:$0xff]
        %v856 = vld [vmem:[#allocation9 + $0x238] sm:$0xff]
        %v857 = vld [vmem:[#allocation9 + $0x240] sm:$0xff]
        %v858 = vld [vmem:[#allocation9 + $0x248] sm:$0xff]
        %v859 = vld [vmem:[#allocation9 + $0x250] sm:$0xff]
        %v860 = vld [vmem:[#allocation9 + $0x258] sm:$0xff]
        %v861 = vld [vmem:[#allocation9 + $0x260] sm:$0xff]
        %v862 = vld [vmem:[#allocation9 + $0x268] sm:$0xff]
        %v863 = vld [vmem:[#allocation9 + $0x270] sm:$0xff]
        %v864 = vld [vmem:[#allocation9 + $0x278] sm:$0xff]
        %v865 = vld [vmem:[#allocation9 + $0x280] sm:$0xff]
        %v866 = vld [vmem:[#allocation9 + $0x288] sm:$0xff]
        %v867 = vld [vmem:[#allocation9 + $0x290] sm:$0xff]
        %v868 = vld [vmem:[#allocation9 + $0x298] sm:$0xff]
        %v869 = vld [vmem:[#allocation9 + $0x2a0] sm:$0xff]
        %v870 = vld [vmem:[#allocation9 + $0x2a8] sm:$0xff]
        %v871 = vld [vmem:[#allocation9 + $0x2b0] sm:$0xff]
        %v872 = vld [vmem:[#allocation9 + $0x2b8] sm:$0xff]
        %v873 = vld [vmem:[#allocation9 + $0x2c0] sm:$0xff]
        %v874 = vld [vmem:[#allocation9 + $0x2c8] sm:$0xff]
        %v875 = vld [vmem:[#allocation9 + $0x2d0] sm:$0xff]
        %v876 = vld [vmem:[#allocation9 + $0x2d8] sm:$0xff]
        %v877 = vld [vmem:[#allocation9 + $0x2e0] sm:$0xff]
        %v878 = vld [vmem:[#allocation9 + $0x2e8] sm:$0xff]
        %v879 = vld [vmem:[#allocation9 + $0x2f0] sm:$0xff]
        %v880 = vld [vmem:[#allocation9 + $0x2f8] sm:$0xff]
        %v881 = vld [vmem:[#allocation9 + $0x300] sm:$0xff]
        %v882 = vld [vmem:[#allocation9 + $0x308] sm:$0xff]
        %v883 = vld [vmem:[#allocation9 + $0x310] sm:$0xff]
        %v884 = vld [vmem:[#allocation9 + $0x318] sm:$0xff]
        %v885 = vld [vmem:[#allocation9 + $0x320] sm:$0xff]
        %v886 = vld [vmem:[#allocation9 + $0x328] sm:$0xff]
        %v887 = vld [vmem:[#allocation9 + $0x330] sm:$0xff]
        %v888 = vld [vmem:[#allocation9 + $0x338] sm:$0xff]
        %v889 = vld [vmem:[#allocation9 + $0x340] sm:$0xff]
        %v890 = vld [vmem:[#allocation9 + $0x348] sm:$0xff]
        %v891 = vld [vmem:[#allocation9 + $0x350] sm:$0xff]
        %v892 = vld [vmem:[#allocation9 + $0x358] sm:$0xff]
        %v893 = vld [vmem:[#allocation9 + $0x360] sm:$0xff]
        %v894 = vld [vmem:[#allocation9 + $0x368] sm:$0xff]
        %v895 = vld [vmem:[#allocation9 + $0x370] sm:$0xff]
        %v896 = vld [vmem:[#allocation9 + $0x378] sm:$0xff]
        %v897 = vld [vmem:[#allocation9 + $0x380] sm:$0xff]
        %v898 = vld [vmem:[#allocation9 + $0x388] sm:$0xff]
        %v899 = vld [vmem:[#allocation9 + $0x390] sm:$0xff]
        %v900 = vld [vmem:[#allocation9 + $0x398] sm:$0xff]
        %v901 = vld [vmem:[#allocation9 + $0x3a0] sm:$0xff]
        %v902 = vld [vmem:[#allocation9 + $0x3a8] sm:$0xff]
        %v903 = vld [vmem:[#allocation9 + $0x3b0] sm:$0xff]
        %v904 = vld [vmem:[#allocation9 + $0x3b8] sm:$0xff]
        %v905 = vld [vmem:[#allocation9 + $0x3c0] sm:$0xff]
        %v906 = vld [vmem:[#allocation9 + $0x3c8] sm:$0xff]
        %v907 = vld [vmem:[#allocation9 + $0x3d0] sm:$0xff]
        %v908 = vld [vmem:[#allocation9 + $0x3d8] sm:$0xff]
        %v909 = vld [vmem:[#allocation9 + $0x3e0] sm:$0xff]
        %v910 = vld [vmem:[#allocation9 + $0x3e8] sm:$0xff]
        %v911 = vld [vmem:[#allocation9 + $0x3f0] sm:$0xff]
        %v912 = vld [vmem:[#allocation9 + $0x3f8] sm:$0xff]
        %913 = vmatprep.subr.mxu0 %v786
        %914 = vmatpush1.msra.mxu0 %v785
        %915 = vmatprep.subr.mxu0 %v794
        %916 = vmatpush1.msra.mxu0 %v793
        %917 = vmatprep.subr.mxu0 %v802
        %918 = vmatpush1.msra.mxu0 %v801
        %919 = vmatprep.subr.mxu0 %v810
        %920 = vmatpush1.msra.mxu0 %v809
        %921 = vmatprep.subr.mxu0 %v818
        %922 = vmatpush1.msra.mxu0 %v817
        %923 = vmatprep.subr.mxu0 %v826
        %924 = vmatpush1.msra.mxu0 %v825
        %925 = vmatprep.subr.mxu0 %v834
        %926 = vmatpush1.msra.mxu0 %v833
        %927 = vmatprep.subr.mxu0 %v842
        %928 = vmatpush1.msra.mxu0 %v841
        %929 = vmatprep.subr.mxu0 %v850
        %930 = vmatpush1.msra.mxu0 %v849
        %931 = vmatprep.subr.mxu0 %v858
        %932 = vmatpush1.msra.mxu0 %v857
        %933 = vmatprep.subr.mxu0 %v866
        %934 = vmatpush1.msra.mxu0 %v865
        %935 = vmatprep.subr.mxu0 %v874
        %936 = vmatpush1.msra.mxu0 %v873
        %937 = vmatprep.subr.mxu0 %v882
        %938 = vmatpush1.msra.mxu0 %v881
        %939 = vmatprep.subr.mxu0 %v890
        %940 = vmatpush1.msra.mxu0 %v889
        %941 = vmatprep.subr.mxu0 %v898
        %942 = vmatpush1.msra.mxu0 %v897
        %943 = vmatprep.subr.mxu0 %v906
        %944 = vmatpush1.msra.mxu0 %v905
        %945 = vmatprep.subr.mxu0 0.0
        %946 = vmatpush1.msra.mxu0 0.0
        %947 = vmatprep.subr.mxu0 0.0
        %948 = vmatpush1.msra.mxu0 0.0
        %949 = vmatprep.subr.mxu0 0.0
        %950 = vmatpush1.msra.mxu0 0.0
        %951 = vmatprep.subr.mxu0 0.0
        %952 = vmatpush1.msra.mxu0 0.0
        %953 = vmatprep.subr.mxu0 0.0
        %954 = vmatpush1.msra.mxu0 0.0
        %955 = vmatprep.subr.mxu0 0.0
        %956 = vmatpush1.msra.mxu0 0.0
        %957 = vmatprep.subr.mxu0 0.0
        %958 = vmatpush1.msra.mxu0 0.0
        %959 = vmatprep.subr.mxu0 0.0
        %960 = vmatpush1.msra.mxu0 0.0
        %961 = vmatprep.subr.mxu0 0.0
        %962 = vmatpush1.msra.mxu0 0.0
        %963 = vmatprep.subr.mxu0 0.0
        %964 = vmatpush1.msra.mxu0 0.0
        %965 = vmatprep.subr.mxu0 0.0
        %966 = vmatpush1.msra.mxu0 0.0
        %967 = vmatprep.subr.mxu0 0.0
        %968 = vmatpush1.msra.mxu0 0.0
        %969 = vmatprep.subr.mxu0 0.0
        %970 = vmatpush1.msra.mxu0 0.0
        %971 = vmatprep.subr.mxu0 0.0
        %972 = vmatpush1.msra.mxu0 0.0
        %973 = vmatprep.subr.mxu0 0.0
        %974 = vmatpush1.msra.mxu0 0.0
        %975 = vmatprep.subr.mxu0 0.0
        %976 = vmatpush1.msra.mxu0 0.0
        %977 = vmatprep.mubr.f32.mxu0 0.0
        %978 = vmatmul.mubr.f32.gmra.mrb[0].mxu0 %v784
        %v979 = vpop.f32.mrb[0].mxu0
        %v980 = vadd.f32 0.0, %v979
        %v981 = vpop.f32.mrb[0].mxu0
        %v982 = vadd.f32 0.0, %v981
        %983 = vdwg.mxu0
        %984 = vmatprep.subr.mxu0 %v788
        %985 = vmatpush1.msra.mxu0 %v787
        %986 = vmatprep.subr.mxu0 %v796
        %987 = vmatpush1.msra.mxu0 %v795
        %988 = vmatprep.subr.mxu0 %v804
        %989 = vmatpush1.msra.mxu0 %v803
        %990 = vmatprep.subr.mxu0 %v812
        %991 = vmatpush1.msra.mxu0 %v811
        %992 = vmatprep.subr.mxu0 %v820
        %993 = vmatpush1.msra.mxu0 %v819
        %994 = vmatprep.subr.mxu0 %v828
        %995 = vmatpush1.msra.mxu0 %v827
        %996 = vmatprep.subr.mxu0 %v836
        %997 = vmatpush1.msra.mxu0 %v835
        %998 = vmatprep.subr.mxu0 %v844
        %999 = vmatpush1.msra.mxu0 %v843
        %1000 = vmatprep.subr.mxu0 %v852
        %1001 = vmatpush1.msra.mxu0 %v851
        %1002 = vmatprep.subr.mxu0 %v860
        %1003 = vmatpush1.msra.mxu0 %v859
        %1004 = vmatprep.subr.mxu0 %v868
        %1005 = vmatpush1.msra.mxu0 %v867
        %1006 = vmatprep.subr.mxu0 %v876
        %1007 = vmatpush1.msra.mxu0 %v875
        %1008 = vmatprep.subr.mxu0 %v884
        %1009 = vmatpush1.msra.mxu0 %v883
        %1010 = vmatprep.subr.mxu0 %v892
        %1011 = vmatpush1.msra.mxu0 %v891
        %1012 = vmatprep.subr.mxu0 %v900
        %1013 = vmatpush1.msra.mxu0 %v899
        %1014 = vmatprep.subr.mxu0 %v908
        %1015 = vmatpush1.msra.mxu0 %v907
        %1016 = vmatprep.subr.mxu0 0.0
        %1017 = vmatpush1.msra.mxu0 0.0
        %1018 = vmatprep.subr.mxu0 0.0
        %1019 = vmatpush1.msra.mxu0 0.0
        %1020 = vmatprep.subr.mxu0 0.0
        %1021 = vmatpush1.msra.mxu0 0.0
        %1022 = vmatprep.subr.mxu0 0.0
        %1023 = vmatpush1.msra.mxu0 0.0
        %1024 = vmatprep.subr.mxu0 0.0
        %1025 = vmatpush1.msra.mxu0 0.0
        %1026 = vmatprep.subr.mxu0 0.0
        %1027 = vmatpush1.msra.mxu0 0.0
        %1028 = vmatprep.subr.mxu0 0.0
        %1029 = vmatpush1.msra.mxu0 0.0
        %1030 = vmatprep.subr.mxu0 0.0
        %1031 = vmatpush1.msra.mxu0 0.0
        %1032 = vmatprep.subr.mxu0 0.0
        %1033 = vmatpush1.msra.mxu0 0.0
        %1034 = vmatprep.subr.mxu0 0.0
        %1035 = vmatpush1.msra.mxu0 0.0
        %1036 = vmatprep.subr.mxu0 0.0
        %1037 = vmatpush1.msra.mxu0 0.0
        %1038 = vmatprep.subr.mxu0 0.0
        %1039 = vmatpush1.msra.mxu0 0.0
        %1040 = vmatprep.subr.mxu0 0.0
        %1041 = vmatpush1.msra.mxu0 0.0
        %1042 = vmatprep.subr.mxu0 0.0
        %1043 = vmatpush1.msra.mxu0 0.0
        %1044 = vmatprep.subr.mxu0 0.0
        %1045 = vmatpush1.msra.mxu0 0.0
        %1046 = vmatprep.subr.mxu0 0.0
        %1047 = vmatpush1.msra.mxu0 0.0
        %1048 = vmatprep.mubr.f32.mxu0 0.0
        %1049 = vmatmul.mubr.f32.gmra.mrb[0].mxu0 %v784
        %v1050 = vpop.f32.mrb[0].mxu0
        %v1051 = vadd.f32 0.0, %v1050
        %v1052 = vpop.f32.mrb[0].mxu0
        %v1053 = vadd.f32 0.0, %v1052
        %1054 = vdwg.mxu0
        %1055 = vmatprep.subr.mxu0 %v790
        %1056 = vmatpush1.msra.mxu0 %v789
        %1057 = vmatprep.subr.mxu0 %v798
        %1058 = vmatpush1.msra.mxu0 %v797
        %1059 = vmatprep.subr.mxu0 %v806
        %1060 = vmatpush1.msra.mxu0 %v805
        %1061 = vmatprep.subr.mxu0 %v814
        %1062 = vmatpush1.msra.mxu0 %v813
        %1063 = vmatprep.subr.mxu0 %v822
        %1064 = vmatpush1.msra.mxu0 %v821
        %1065 = vmatprep.subr.mxu0 %v830
        %1066 = vmatpush1.msra.mxu0 %v829
        %1067 = vmatprep.subr.mxu0 %v838
        %1068 = vmatpush1.msra.mxu0 %v837
        %1069 = vmatprep.subr.mxu0 %v846
        %1070 = vmatpush1.msra.mxu0 %v845
        %1071 = vmatprep.subr.mxu0 %v854
        %1072 = vmatpush1.msra.mxu0 %v853
        %1073 = vmatprep.subr.mxu0 %v862
        %1074 = vmatpush1.msra.mxu0 %v861
        %1075 = vmatprep.subr.mxu0 %v870
        %1076 = vmatpush1.msra.mxu0 %v869
        %1077 = vmatprep.subr.mxu0 %v878
        %1078 = vmatpush1.msra.mxu0 %v877
        %1079 = vmatprep.subr.mxu0 %v886
        %1080 = vmatpush1.msra.mxu0 %v885
        %1081 = vmatprep.subr.mxu0 %v894
        %1082 = vmatpush1.msra.mxu0 %v893
        %1083 = vmatprep.subr.mxu0 %v902
        %1084 = vmatpush1.msra.mxu0 %v901
        %1085 = vmatprep.subr.mxu0 %v910
        %1086 = vmatpush1.msra.mxu0 %v909
        %1087 = vmatprep.subr.mxu0 0.0
        %1088 = vmatpush1.msra.mxu0 0.0
        %1089 = vmatprep.subr.mxu0 0.0
        %1090 = vmatpush1.msra.mxu0 0.0
        %1091 = vmatprep.subr.mxu0 0.0
        %1092 = vmatpush1.msra.mxu0 0.0
        %1093 = vmatprep.subr.mxu0 0.0
        %1094 = vmatpush1.msra.mxu0 0.0
        %1095 = vmatprep.subr.mxu0 0.0
        %1096 = vmatpush1.msra.mxu0 0.0
        %1097 = vmatprep.subr.mxu0 0.0
        %1098 = vmatpush1.msra.mxu0 0.0
        %1099 = vmatprep.subr.mxu0 0.0
        %1100 = vmatpush1.msra.mxu0 0.0
        %1101 = vmatprep.subr.mxu0 0.0
        %1102 = vmatpush1.msra.mxu0 0.0
        %1103 = vmatprep.subr.mxu0 0.0
        %1104 = vmatpush1.msra.mxu0 0.0
        %1105 = vmatprep.subr.mxu0 0.0
        %1106 = vmatpush1.msra.mxu0 0.0
        %1107 = vmatprep.subr.mxu0 0.0
        %1108 = vmatpush1.msra.mxu0 0.0
        %1109 = vmatprep.subr.mxu0 0.0
        %1110 = vmatpush1.msra.mxu0 0.0
        %1111 = vmatprep.subr.mxu0 0.0
        %1112 = vmatpush1.msra.mxu0 0.0
        %1113 = vmatprep.subr.mxu0 0.0
        %1114 = vmatpush1.msra.mxu0 0.0
        %1115 = vmatprep.subr.mxu0 0.0
        %1116 = vmatpush1.msra.mxu0 0.0
        %1117 = vmatprep.subr.mxu0 0.0
        %1118 = vmatpush1.msra.mxu0 0.0
        %1119 = vmatprep.mubr.f32.mxu0 0.0
        %1120 = vmatmul.mubr.f32.gmra.mrb[0].mxu0 %v784
        %v1121 = vpop.f32.mrb[0].mxu0
        %v1122 = vadd.f32 0.0, %v1121
        %v1123 = vpop.f32.mrb[0].mxu0
        %v1124 = vadd.f32 0.0, %v1123
        %1125 = vdwg.mxu0
        %1126 = vmatprep.subr.mxu0 %v792
        %1127 = vmatpush1.msra.mxu0 %v791
        %1128 = vmatprep.subr.mxu0 %v800
        %1129 = vmatpush1.msra.mxu0 %v799
        %1130 = vmatprep.subr.mxu0 %v808
        %1131 = vmatpush1.msra.mxu0 %v807
        %1132 = vmatprep.subr.mxu0 %v816
        %1133 = vmatpush1.msra.mxu0 %v815
        %1134 = vmatprep.subr.mxu0 %v824
        %1135 = vmatpush1.msra.mxu0 %v823
        %1136 = vmatprep.subr.mxu0 %v832
        %1137 = vmatpush1.msra.mxu0 %v831
        %1138 = vmatprep.subr.mxu0 %v840
        %1139 = vmatpush1.msra.mxu0 %v839
        %1140 = vmatprep.subr.mxu0 %v848
        %1141 = vmatpush1.msra.mxu0 %v847
        %1142 = vmatprep.subr.mxu0 %v856
        %1143 = vmatpush1.msra.mxu0 %v855
        %1144 = vmatprep.subr.mxu0 %v864
        %1145 = vmatpush1.msra.mxu0 %v863
        %1146 = vmatprep.subr.mxu0 %v872
        %1147 = vmatpush1.msra.mxu0 %v871
        %1148 = vmatprep.subr.mxu0 %v880
        %1149 = vmatpush1.msra.mxu0 %v879
        %1150 = vmatprep.subr.mxu0 %v888
        %1151 = vmatpush1.msra.mxu0 %v887
        %1152 = vmatprep.subr.mxu0 %v896
        %1153 = vmatpush1.msra.mxu0 %v895
        %1154 = vmatprep.subr.mxu0 %v904
        %1155 = vmatpush1.msra.mxu0 %v903
        %1156 = vmatprep.subr.mxu0 %v912
        %1157 = vmatpush1.msra.mxu0 %v911
        %1158 = vmatprep.subr.mxu0 0.0
        %1159 = vmatpush1.msra.mxu0 0.0
        %1160 = vmatprep.subr.mxu0 0.0
        %1161 = vmatpush1.msra.mxu0 0.0
        %1162 = vmatprep.subr.mxu0 0.0
        %1163 = vmatpush1.msra.mxu0 0.0
        %1164 = vmatprep.subr.mxu0 0.0
        %1165 = vmatpush1.msra.mxu0 0.0
        %1166 = vmatprep.subr.mxu0 0.0
        %1167 = vmatpush1.msra.mxu0 0.0
        %1168 = vmatprep.subr.mxu0 0.0
        %1169 = vmatpush1.msra.mxu0 0.0
        %1170 = vmatprep.subr.mxu0 0.0
        %1171 = vmatpush1.msra.mxu0 0.0
        %1172 = vmatprep.subr.mxu0 0.0
        %1173 = vmatpush1.msra.mxu0 0.0
        %1174 = vmatprep.subr.mxu0 0.0
        %1175 = vmatpush1.msra.mxu0 0.0
        %1176 = vmatprep.subr.mxu0 0.0
        %1177 = vmatpush1.msra.mxu0 0.0
        %1178 = vmatprep.subr.mxu0 0.0
        %1179 = vmatpush1.msra.mxu0 0.0
        %1180 = vmatprep.subr.mxu0 0.0
        %1181 = vmatpush1.msra.mxu0 0.0
        %1182 = vmatprep.subr.mxu0 0.0
        %1183 = vmatpush1.msra.mxu0 0.0
        %1184 = vmatprep.subr.mxu0 0.0
        %1185 = vmatpush1.msra.mxu0 0.0
        %1186 = vmatprep.subr.mxu0 0.0
        %1187 = vmatpush1.msra.mxu0 0.0
        %1188 = vmatprep.subr.mxu0 0.0
        %1189 = vmatpush1.msra.mxu0 0.0
        %1190 = vmatprep.mubr.f32.mxu0 0.0
        %1191 = vmatmul.mubr.f32.gmra.mrb[0].mxu0 %v784
        %v1192 = vpop.f32.mrb[0].mxu0
        %v1193 = vadd.f32 0.0, %v1192
        %v1194 = vpop.f32.mrb[0].mxu0
        %v1195 = vadd.f32 0.0, %v1194
        %1196 = vdwg.mxu0
        %v1197 = vmul.f32 %v980, 0.025
        %v1198 = vmul.f32 %v982, 0.025
        %v1199 = vmul.f32 %v1051, 0.025
        %v1200 = vmul.f32 %v1053, 0.025
        %v1201 = vmul.f32 %v1122, 0.025
        %v1202 = vmul.f32 %v1124, 0.025
        %v1203 = vmul.f32 %v1193, 0.025
        %v1204 = vmul.f32 %v1195, 0.025
        %v1205 = vadd.f32 %v355, %v1197
        %v1206 = vadd.f32 %v356, %v1198
        %v1207 = vadd.f32 %v357, %v1199
        %v1208 = vadd.f32 %v358, %v1200
        %v1209 = vadd.f32 %v359, %v1201
        %v1210 = vadd.f32 %v360, %v1202
        %v1211 = vadd.f32 %v361, %v1203
        %v1212 = vadd.f32 %v362, %v1204
        %v1213 = vsub.f32 %v355, %v363
        %v1214 = vsub.f32 %v356, %v364
        %v1215 = vsub.f32 %v357, %v365
        %v1216 = vsub.f32 %v358, %v366
        %v1217 = vsub.f32 %v359, %v367
        %v1218 = vsub.f32 %v360, %v368
        %v1219 = vsub.f32 %v361, %v369
        %v1220 = vsub.f32 %v362, %v370
        %v1221 = vmul.f32 %v1213, 4.8828126e-05
        %v1222 = vmul.f32 %v1214, 4.8828126e-05
        %v1223 = vmul.f32 %v1215, 4.8828126e-05
        %v1224 = vmul.f32 %v1216, 4.8828126e-05
        %v1225 = vmul.f32 %v1217, 4.8828126e-05
        %v1226 = vmul.f32 %v1218, 4.8828126e-05
        %v1227 = vmul.f32 %v1219, 4.8828126e-05
        %v1228 = vmul.f32 %v1220, 4.8828126e-05
        %v1229 = vsub.f32 %v1205, %v1221
        %v1230 = vsub.f32 %v1206, %v1222
        %v1231 = vsub.f32 %v1207, %v1223
        %v1232 = vsub.f32 %v1208, %v1224
        %v1233 = vsub.f32 %v1209, %v1225
        %v1234 = vsub.f32 %v1210, %v1226
        %v1235 = vsub.f32 %v1211, %v1227
        %v1236 = vsub.f32 %v1212, %v1228
        %v1237 = vld [vmem:[%s301] sm:$0xff]
        %v1238 = vld [vmem:[%s301 + $0x8] sm:$0xff]
        %v1239 = vld [vmem:[%s301 + $0x10] sm:$0xff]
        %v1240 = vld [vmem:[%s301 + $0x18] sm:$0xff]
        %v1241 = vld [vmem:[%s301 + $0x20] sm:$0xff]
        %v1242 = vld [vmem:[%s301 + $0x28] sm:$0xff]
        %v1243 = vld [vmem:[%s301 + $0x30] sm:$0xff]
        %v1244 = vld [vmem:[%s301 + $0x38] sm:$0xff]
        %v1245 = vmul.f32 %v1237, 0.2236068
        %v1246 = vmul.f32 %v1238, 0.2236068
        %v1247 = vmul.f32 %v1239, 0.2236068
        %v1248 = vmul.f32 %v1240, 0.2236068
        %v1249 = vmul.f32 %v1241, 0.2236068
        %v1250 = vmul.f32 %v1242, 0.2236068
        %v1251 = vmul.f32 %v1243, 0.2236068
        %v1252 = vmul.f32 %v1244, 0.2236068
        %v1253 = vadd.f32 %v1229, %v1245
        %v1254 = vadd.f32 %v1230, %v1246
        %v1255 = vadd.f32 %v1231, %v1247
        %v1256 = vadd.f32 %v1232, %v1248
        %v1257 = vadd.f32 %v1233, %v1249
        %v1258 = vadd.f32 %v1234, %v1250
        %v1259 = vadd.f32 %v1235, %v1251
        %v1260 = vadd.f32 %v1236, %v1252
        %1261 = vst [vmem:[#allocation11] sm:$0xff] %v1253
        %1262 = vst [vmem:[#allocation11 + $0x8] sm:$0xff] %v1254
        %1263 = vst [vmem:[#allocation11 + $0x10] sm:$0xff] %v1255
        %1264 = vst [vmem:[#allocation11 + $0x18] sm:$0xff] %v1256
        %1265 = vst [vmem:[#allocation11 + $0x20] sm:$0xff] %v1257
        %1266 = vst [vmem:[#allocation11 + $0x28] sm:$0xff] %v1258
        %1267 = vst [vmem:[#allocation11 + $0x30] sm:$0xff] %v1259
        %1268 = vst [vmem:[#allocation11 + $0x38] sm:$0xff] %v1260
        // Predicated region
        $region73: #{tpu_custom_call.1} parent=47 // pred_check
          %p1269 = pneg %p187
        $region74: #{tpu_custom_call.1} parent=47 // pred_check_branch
          %1271 = sbr.rel (%p1269) target = $region76
        $region75: #{tpu_custom_call.1} parent=47 // pred_region
          %s1273 = ssub.s32 1024, 1024
          %1274 = vsyncadd [#allocation4], %s1273
          %s1276 = sshll.u32 [#allocation11], 4
          %s1277 = int_to_ptr.vmem [resolvable:$true] %s1276
          %1279 = dma.vmem_to_hbm [thread:$0]  %s1277, 1024, %s7, [#allocation4]
        $region76: #{tpu_custom_call.1} parent=47 // pred_fallthru
          _
        // Predicated region
        $region77: #{tpu_custom_call.1} parent=47 // pred_check
          %p1280 = pneg %p187
        $region78: #{tpu_custom_call.1} parent=47 // pred_check_branch
          %1282 = sbr.rel (%p1280) target = $region80
        $region79: #{tpu_custom_call.1} parent=47 // pred_region
          %1283 = dma.done [#allocation4], 1024
        $region80: #{tpu_custom_call.1} parent=47 // pred_fallthru
          _
      $region48: #{tpu_custom_call.1} parent=5 // pred_fallthru
        _
      %p1284 = scmp.le.s32.totalorder 2, %s17
      // Predicated region
      $region81: #{tpu_custom_call.1} parent=5 // pred_check
        %p1285 = pneg %p1284
      $region82: #{tpu_custom_call.1} parent=5 // pred_check_branch
        %1287 = sbr.rel (%p1285) target = $region84
      $region83: #{tpu_custom_call.1} parent=5 // pred_region
        %s1288 = ssub.s32 %s17, 2
      $region84: #{tpu_custom_call.1} parent=5 // pred_fallthru
        _
    $region6: #{tpu_custom_call.1} parent=1 // loop_footer
      %s21 = sadd.s32 1, %s17
    $region7: #{tpu_custom_call.1} parent=1 // loop_footer_branch
      %16 = sbr.rel target = $region3
    $region8: #{tpu_custom_call.1} parent=1 // loop_exit
      _
    %1289 = vsyncpa [#allocation3], 1
    %s1290 = scalar_lea.sflag [#allocation3], 1
    %1291 = vsyncpa %s1290, 1
    %1292 = vsyncpa [#allocation6], 1
    %1293 = vsyncpa [#allocation10], 1
    %1294 = vsyncpa [#allocation4], 1
    %s1295 = scalar_lea.sflag [#allocation4], 1
    %1296 = vsyncpa %s1295, 1

</llo_original>
